<compile_context>
chip_gen: v7x
topology: tpu7x:2x2x1
jax: 0.10.0
libtpu: 0.0.40
codegen_flags: <defaults>
</compile_context>

<pallas_src>
import functools

import jax
import jax.numpy as jnp
from jax import lax
from jax.experimental import pallas as pl
from jax.experimental.pallas import tpu as pltpu

EPS = 1e-5


def _vmem_limit_bytes():
    # Raise the scoped VMEM limit (default is 32 MiB) but stay under physical VMEM.
    try:
        cap = int(getattr(pltpu.get_tpu_info(), "vmem_capacity_bytes",
                          64 * 1024 * 1024))
    except Exception:
        cap = 64 * 1024 * 1024
    return int(min(cap * 3 // 4, 100 * 1024 * 1024))


# ---------------------------------------------------------------------------
# Fused dense-layer kernel (one image per grid step, channel-major layout)
# ---------------------------------------------------------------------------
def _dense_layer_kernel(x_ref, s1_ref, b1_ref, w1_ref, s2_ref, b2_ref,
                        w2_ref, mask_ref, o_ref, p_ref, *, H, W):
    """BN1+ReLU+1x1conv -> BN2+ReLU+3x3conv for one image.

    x_ref   : (1, C_total, Np) f32   feature stack on the padded spatial grid
    s1/b1   : (C_total, 1)     f32   folded BN1 scale/shift (zero beyond cin)
    w1_ref  : (Cmid, C_total)  bf16  1x1 conv weight (zero beyond cin)
    s2/b2   : (Cmid, 1)        f32   folded BN2 scale/shift
    w2_ref  : (9, G, Cmid)     bf16  3x3 conv weight, one (G, Cmid) slab per tap
    mask_ref: (1, Np)          f32   1 on interior spatial positions, 0 on border
    o_ref   : (1, G, Np)       f32   new features (accumulated in place in VMEM)
    p_ref   : (Cmid, Np+2*(Wp+1)) bf16 scratch: margin-extended bottleneck act.
    """
    Wp = W + 2
    Np = (H + 2) * Wp
    base = Wp + 1                      # margin so every tap shift stays in bounds

    # ---- BN1 (folded) + ReLU + 1x1 conv:  bott = W1t @ relu(x*s1 + b1) ----
    x = x_ref[0]                                            # (C_total, Np) f32
    a1 = jnp.maximum(x * s1_ref[...] + b1_ref[...], 0.0)
    bott = jnp.dot(w1_ref[...], a1.astype(jnp.bfloat16),
                   preferred_element_type=jnp.float32)      # (Cmid, Np) f32

    # ---- BN2 (folded) + ReLU; force exact zeros on the padded border ----
    a2 = jnp.maximum(bott * s2_ref[...] + b2_ref[...], 0.0)
    a2 = jnp.where(mask_ref[...] > 0.5, a2, 0.0)

    @pl.when(pl.program_id(0) == 0)
    def _():
        # Zero the shift margins once; the central Np columns are fully
        # overwritten every grid step, so border zeros persist.
        p_ref[...] = jnp.zeros_like(p_ref)

    p_ref[:, base:base + Np] = a2.astype(jnp.bfloat16)

    # ---- 3x3 conv (padding=1) as 9 lane-shifted matmuls, accumulated in VMEM ----
    for t in range(9):
        ky, kx = t // 3, t % 3
        shift = (ky - 1) * Wp + (kx - 1)
        rhs = p_ref[:, base + shift: base + shift + Np]     # (Cmid, Np) bf16
        contrib = jnp.dot(w2_ref[t], rhs,
                          preferred_element_type=jnp.float32)
        if t == 0:
            o_ref[0] = contrib
        else:
            o_ref[0] += contrib
    # Border positions of the padded grid are not valid outputs -> keep them at 0.
    o_ref[0] = jnp.where(mask_ref[...] > 0.5, o_ref[0], 0.0)


def _dense_layer(feat, s1, b1, w1t, s2, b2, w2t, mask, H, W):
    B, C_total, Np = feat.shape
    Cmid = w1t.shape[0]
    G = w2t.shape[1]
    Wp = W + 2
    kernel = functools.partial(_dense_layer_kernel, H=H, W=W)
    return pl.pallas_call(
        kernel,
        out_shape=jax.ShapeDtypeStruct((B, G, Np), jnp.float32),
        grid_spec=pltpu.PrefetchScalarGridSpec(
            num_scalar_prefetch=0,
            grid=(B,),
            in_specs=[
                pl.BlockSpec((1, C_total, Np), lambda b: (b, 0, 0)),
                pl.BlockSpec((C_total, 1), lambda b: (0, 0)),
                pl.BlockSpec((C_total, 1), lambda b: (0, 0)),
                pl.BlockSpec((Cmid, C_total), lambda b: (0, 0)),
                pl.BlockSpec((Cmid, 1), lambda b: (0, 0)),
                pl.BlockSpec((Cmid, 1), lambda b: (0, 0)),
                pl.BlockSpec((9, G, Cmid), lambda b: (0, 0, 0)),
                pl.BlockSpec((1, Np), lambda b: (0, 0)),
            ],
            out_specs=pl.BlockSpec((1, G, Np), lambda b: (b, 0, 0)),
            scratch_shapes=[pltpu.VMEM((Cmid, Np + 2 * (Wp + 1)), jnp.bfloat16)],
        ),
        compiler_params=pltpu.CompilerParams(
            dimension_semantics=("parallel",),
            vmem_limit_bytes=_vmem_limit_bytes(),
        ),
    )(feat, s1, b1, w1t, s2, b2, w2t, mask)


# ---------------------------------------------------------------------------
# _DenseBlock orchestration (layout / BN folding / weight padding in plain JAX)
# ---------------------------------------------------------------------------
@jax.jit
def dense_block_forward(x_nchw, params):
    """_DenseBlock forward: NCHW in -> NCHW out (input ++ all new features)."""
    x = x_nchw.astype(jnp.float32)
    B, C0, H, W = x.shape
    Hp, Wp = H + 2, W + 2
    Np = Hp * Wp
    L = len(params)
    Cmid = params[0]["w2"].shape[2]
    G = params[0]["w2"].shape[3]
    C_total = C0 + L * G

    # One channel-major feature buffer on the zero-padded spatial grid.
    xp = jnp.pad(x, ((0, 0), (0, 0), (1, 1), (1, 1))).reshape(B, C0, Np)
    feat = jnp.concatenate(
        [xp, jnp.zeros((B, C_total - C0, Np), jnp.float32)], axis=1)

    # Interior-position mask (1 inside the original HxW grid, 0 on the border).
    yy, xx = jnp.meshgrid(jnp.arange(Hp), jnp.arange(Wp), indexing="ij")
    mask = ((yy >= 1) & (yy <= H) & (xx >= 1) & (xx <= W))
    mask = mask.astype(jnp.float32).reshape(1, Np)

    for i, p in enumerate(params):
        cin = C0 + i * G
        # Fold eval-mode BatchNorm into per-channel scale/shift (f32).
        s1 = p["gamma1"] * lax.rsqrt(p["var1"] + EPS)
        b1 = p["beta1"] - p["mean1"] * s1
        s2 = p["gamma2"] * lax.rsqrt(p["var2"] + EPS)
        b2 = p["beta2"] - p["mean2"] * s2
        # Zero-pad layer-i params to the full channel count so the kernel reads the
        # whole feature buffer (channels >= cin contribute exactly 0 -> no concat).
        s1p = jnp.zeros((C_total, 1), jnp.float32).at[:cin, 0].set(s1)
        b1p = jnp.zeros((C_total, 1), jnp.float32).at[:cin, 0].set(b1)
        w1t = jnp.zeros((Cmid, C_total), jnp.float32).at[:, :cin].set(p["w1"].T)
        w1t = w1t.astype(jnp.bfloat16)
        w2t = jnp.transpose(p["w2"], (0, 1, 3, 2)).reshape(9, G, Cmid)
        w2t = w2t.astype(jnp.bfloat16)

        new = _dense_layer(feat, s1p, b1p, w1t,
                           s2[:, None], b2[:, None], w2t, mask, H, W)
        feat = feat.at[:, cin:cin + G, :].set(new)

    out = feat.reshape(B, C_total, Hp, Wp)[:, :, 1:H + 1, 1:W + 1]
    return out


def make_dense_block_params(key, num_layers, num_input_features, bn_size, growth_rate):
    params = []
    cin = num_input_features
    cmid = bn_size * growth_rate
    for i in range(num_layers):
        k = jax.random.split(jax.random.fold_in(key, i), 10)
        params.append(dict(
            gamma1=1.0 + 0.1 * jax.random.normal(k[0], (cin,), jnp.float32),
            beta1=0.1 * jax.random.normal(k[1], (cin,), jnp.float32),
            mean1=0.1 * jax.random.normal(k[2], (cin,), jnp.float32),
            var1=1.0 + 0.2 * jax.random.uniform(k[3], (cin,), jnp.float32),
            w1=0.2 * jax.random.normal(k[4], (cin, cmid), jnp.float32),            # conv1.weight.T
            gamma2=1.0 + 0.1 * jax.random.normal(k[5], (cmid,), jnp.float32),
            beta2=0.1 * jax.random.normal(k[6], (cmid,), jnp.float32),
            mean2=0.1 * jax.random.normal(k[7], (cmid,), jnp.float32),
            var2=1.0 + 0.2 * jax.random.uniform(k[8], (cmid,), jnp.float32),
            w2=0.2 * jax.random.normal(k[9], (3, 3, cmid, growth_rate), jnp.float32),  # HWIO
        ))
        cin += growth_rate
    return params


# ---------------------------------------------------------------------------
# Pure-JAX reference (NCHW, mirrors the PyTorch module in eval mode).
# conv_dtype=bfloat16 mimics the kernel's bf16 MXU operands (f32 accumulation).
# ---------------------------------------------------------------------------
def ref_dense_block(x_nchw, params, conv_dtype=jnp.float32):
    x = x_nchw.astype(jnp.float32)
    feats = [x]
    for p in params:
        cat = jnp.concatenate(feats, axis=1)
        s1 = p["gamma1"] * lax.rsqrt(p["var1"] + EPS)
        b1 = p["beta1"] - p["mean1"] * s1
        a1 = jax.nn.relu(cat * s1[None, :, None, None] + b1[None, :, None, None])
        w1 = jnp.transpose(p["w1"], (1, 0))[:, :, None, None]           # OIHW 1x1
        bott = lax.conv_general_dilated(
            a1.astype(conv_dtype), w1.astype(conv_dtype), (1, 1), "VALID",
            dimension_numbers=("NCHW", "OIHW", "NCHW"),
            preferred_element_type=jnp.float32)
        s2 = p["gamma2"] * lax.rsqrt(p["var2"] + EPS)
        b2 = p["beta2"] - p["mean2"] * s2
        a2 = jax.nn.relu(bott * s2[None, :, None, None] + b2[None, :, None, None])
        w2 = jnp.transpose(p["w2"], (3, 2, 0, 1))                       # OIHW 3x3
        new = lax.conv_general_dilated(
            a2.astype(conv_dtype), w2.astype(conv_dtype), (1, 1),
            ((1, 1), (1, 1)),
            dimension_numbers=("NCHW", "OIHW", "NCHW"),
            preferred_element_type=jnp.float32)
        feats.append(new)
    return jnp.concatenate(feats, axis=1)


if __name__ == "__main__":
    key = jax.random.PRNGKey(0)
    B, C0, H, W = 2, 8, 16, 16
    num_layers, bn_size, growth_rate = 3, 2, 4

    kx, kp = jax.random.split(key)
    x = jax.random.normal(kx, (B, C0, H, W), jnp.float32)        # NCHW, like PyTorch
    params = make_dense_block_params(kp, num_layers, C0, bn_size, growth_rate)

    out = jax.block_until_ready(dense_block_forward(x, params))
    assert out.shape == (B, C0 + num_layers * growth_rate, H, W), out.shape

    # Tight check vs a reference with the same bf16 rounding points (independent
    # XLA conv implements the spatial math); only MXU accumulation order differs.
    ref_bf16 = ref_dense_block(x, params, conv_dtype=jnp.bfloat16)
    err_exact = float(jnp.max(jnp.abs(out - ref_bf16)))
    # Semantic check vs the pure-f32 reference (tolerance sized for bf16 operands).
    ref_f32 = ref_dense_block(x, params, conv_dtype=jnp.float32)
    err_sem = float(jnp.max(jnp.abs(out - ref_f32)))
    tol_sem = 5e-2 * (1.0 + float(jnp.max(jnp.abs(ref_f32))))
    if err_exact > 2e-2 or err_sem > tol_sem:
        raise SystemExit(
            f"mismatch: err_vs_bf16_ref={err_exact:.3e}, "
            f"err_vs_f32_ref={err_sem:.3e} (tol {tol_sem:.3e})")
    print("KERNEL_OK")
</pallas_src>

<mosaic_0001>
module attributes {stable_mosaic.version = 11 : i64} {
  func.func @_dense_layer_kernel(%arg0: i32, %arg1: memref<1x20x324xf32, #tpu.memory_space<vmem>>, %arg2: memref<20x1xf32, #tpu.memory_space<vmem>>, %arg3: memref<20x1xf32, #tpu.memory_space<vmem>>, %arg4: memref<8x20xbf16, #tpu.memory_space<vmem>>, %arg5: memref<8x1xf32, #tpu.memory_space<vmem>>, %arg6: memref<8x1xf32, #tpu.memory_space<vmem>>, %arg7: memref<9x4x8xbf16, #tpu.memory_space<vmem>>, %arg8: memref<1x324xf32, #tpu.memory_space<vmem>>, %arg9: memref<1x4x324xf32, #tpu.memory_space<vmem>>, %arg10: memref<8x362xbf16, #tpu.memory_space<vmem>>) attributes {dimension_semantics = [#tpu.dimension_semantics<parallel>], iteration_bounds = array<i64: 2>, scalar_prefetch = 0 : i64, scratch_operands = 1 : i64, tpu.core_type = #tpu.core_type<tc>, window_params = [{transform_indices = @transform_0, window_bounds = array<i64: 1, 20, 324>}, {pipeline_mode = #tpu.pipeline_mode<synchronous>, transform_indices = @transform_1, window_bounds = array<i64: 20, 1>}, {pipeline_mode = #tpu.pipeline_mode<synchronous>, transform_indices = @transform_2, window_bounds = array<i64: 20, 1>}, {pipeline_mode = #tpu.pipeline_mode<synchronous>, transform_indices = @transform_3, window_bounds = array<i64: 8, 20>}, {pipeline_mode = #tpu.pipeline_mode<synchronous>, transform_indices = @transform_4, window_bounds = array<i64: 8, 1>}, {pipeline_mode = #tpu.pipeline_mode<synchronous>, transform_indices = @transform_5, window_bounds = array<i64: 8, 1>}, {pipeline_mode = #tpu.pipeline_mode<synchronous>, transform_indices = @transform_6, window_bounds = array<i64: 9, 4, 8>}, {pipeline_mode = #tpu.pipeline_mode<synchronous>, transform_indices = @transform_7, window_bounds = array<i64: 1, 324>}, {transform_indices = @transform_8, window_bounds = array<i64: 1, 4, 324>}]} {
    %c0 = arith.constant 0 : index
    %c0_0 = arith.constant 0 : index
    %c0_1 = arith.constant 0 : index
    %0 = vector.load %arg1[%c0, %c0_0, %c0_1] : memref<1x20x324xf32, #tpu.memory_space<vmem>>, vector<1x20x324xf32>
    %1 = vector.shape_cast %0 : vector<1x20x324xf32> to vector<20x324xf32>
    %c0_2 = arith.constant 0 : index
    %c0_3 = arith.constant 0 : index
    %2 = vector.load %arg2[%c0_2, %c0_3] : memref<20x1xf32, #tpu.memory_space<vmem>>, vector<20x1xf32>
    %3 = vector.broadcast %2 : vector<20x1xf32> to vector<20x324xf32>
    %4 = arith.mulf %1, %3 : vector<20x324xf32>
    %c0_4 = arith.constant 0 : index
    %c0_5 = arith.constant 0 : index
    %5 = vector.load %arg3[%c0_4, %c0_5] : memref<20x1xf32, #tpu.memory_space<vmem>>, vector<20x1xf32>
    %6 = vector.broadcast %5 : vector<20x1xf32> to vector<20x324xf32>
    %7 = arith.addf %4, %6 : vector<20x324xf32>
    %cst = arith.constant 0.000000e+00 : f32
    %8 = vector.broadcast %cst : f32 to vector<20x324xf32>
    %9 = arith.maximumf %7, %8 : vector<20x324xf32>
    %c0_6 = arith.constant 0 : index
    %c0_7 = arith.constant 0 : index
    %10 = vector.load %arg4[%c0_6, %c0_7] : memref<8x20xbf16, #tpu.memory_space<vmem>>, vector<8x20xbf16>
    %11 = arith.truncf %9 : vector<20x324xf32> to vector<20x324xbf16>
    %cst_8 = arith.constant dense<0.000000e+00> : vector<8x324xf32>
    %12 = tpu.matmul %10, %11, %cst_8 {dimension_numbers = #tpu.dot_dimension_numbers<[1], [0], [0], [1], [0, 0, 1, 1], [], []>} : vector<8x20xbf16>, vector<20x324xbf16>, vector<8x324xf32> -> vector<8x324xf32>
    %c0_9 = arith.constant 0 : index
    %c0_10 = arith.constant 0 : index
    %13 = vector.load %arg5[%c0_9, %c0_10] : memref<8x1xf32, #tpu.memory_space<vmem>>, vector<8x1xf32>
    %14 = vector.broadcast %13 : vector<8x1xf32> to vector<8x324xf32>
    %15 = arith.mulf %12, %14 : vector<8x324xf32>
    %c0_11 = arith.constant 0 : index
    %c0_12 = arith.constant 0 : index
    %16 = vector.load %arg6[%c0_11, %c0_12] : memref<8x1xf32, #tpu.memory_space<vmem>>, vector<8x1xf32>
    %17 = vector.broadcast %16 : vector<8x1xf32> to vector<8x324xf32>
    %18 = arith.addf %15, %17 : vector<8x324xf32>
    %cst_13 = arith.constant 0.000000e+00 : f32
    %19 = vector.broadcast %cst_13 : f32 to vector<8x324xf32>
    %20 = arith.maximumf %18, %19 : vector<8x324xf32>
    %c0_14 = arith.constant 0 : index
    %c0_15 = arith.constant 0 : index
    %21 = vector.load %arg8[%c0_14, %c0_15] : memref<1x324xf32, #tpu.memory_space<vmem>>, vector<1x324xf32>
    %cst_16 = arith.constant 5.000000e-01 : f32
    %22 = vector.broadcast %cst_16 : f32 to vector<1x324xf32>
    %23 = arith.cmpf ogt, %21, %22 : vector<1x324xf32>
    %cst_17 = arith.constant 0.000000e+00 : f32
    %24 = vector.shape_cast %23 : vector<1x324xi1> to vector<1x324xi1>
    %25 = vector.broadcast %24 : vector<1x324xi1> to vector<8x324xi1>
    %26 = vector.broadcast %cst_17 : f32 to vector<8x324xf32>
    %27 = arith.select %25, %20, %26 : vector<8x324xi1>, vector<8x324xf32>
    %c0_i32 = arith.constant 0 : i32
    %28 = arith.cmpi eq, %arg0, %c0_i32 : i32
    %29 = arith.extui %28 : i1 to i32
    %c0_i32_18 = arith.constant 0 : i32
    %30 = arith.cmpi ne, %29, %c0_i32_18 : i32
    scf.if %30 {
      %cst_122 = arith.constant 0.000000e+00 : bf16
      %132 = vector.broadcast %cst_122 : bf16 to vector<8x362xbf16>
      %c0_123 = arith.constant 0 : index
      %c0_124 = arith.constant 0 : index
      %133 = vector.load %arg10[%c0_123, %c0_124] : memref<8x362xbf16, #tpu.memory_space<vmem>>, vector<8x362xbf16>
      tpu.vector_store %arg10[%c0_123, %c0_124], %132 {strides = array<i32>} : memref<8x362xbf16, #tpu.memory_space<vmem>>, vector<8x362xbf16>,
    } else {
    }
    %31 = arith.truncf %27 : vector<8x324xf32> to vector<8x324xbf16>
    %c0_19 = arith.constant 0 : index
    %c19 = arith.constant 19 : index
    %32 = vector.load %arg10[%c0_19, %c19] : memref<8x362xbf16, #tpu.memory_space<vmem>>, vector<8x324xbf16>
    tpu.vector_store %arg10[%c0_19, %c19], %31 {strides = array<i32>} : memref<8x362xbf16, #tpu.memory_space<vmem>>, vector<8x324xbf16>,
    %c0_20 = arith.constant 0 : index
    %c0_21 = arith.constant 0 : index
    %33 = vector.load %arg10[%c0_20, %c0_21] : memref<8x362xbf16, #tpu.memory_space<vmem>>, vector<8x324xbf16>
    %c0_22 = arith.constant 0 : index
    %c0_23 = arith.constant 0 : index
    %c0_24 = arith.constant 0 : index
    %34 = vector.load %arg7[%c0_22, %c0_23, %c0_24] : memref<9x4x8xbf16, #tpu.memory_space<vmem>>, vector<1x4x8xbf16>
    %35 = vector.shape_cast %34 : vector<1x4x8xbf16> to vector<4x8xbf16>
    %cst_25 = arith.constant dense<0.000000e+00> : vector<4x324xf32>
    %36 = tpu.matmul %35, %33, %cst_25 {dimension_numbers = #tpu.dot_dimension_numbers<[1], [0], [0], [1], [0, 0, 1, 1], [], []>} : vector<4x8xbf16>, vector<8x324xbf16>, vector<4x324xf32> -> vector<4x324xf32>
    %c0_26 = arith.constant 0 : index
    %c0_27 = arith.constant 0 : index
    %c0_28 = arith.constant 0 : index
    %37 = vector.load %arg9[%c0_26, %c0_27, %c0_28] : memref<1x4x324xf32, #tpu.memory_space<vmem>>, vector<1x4x324xf32>
    %38 = vector.shape_cast %37 : vector<1x4x324xf32> to vector<4x324xf32>
    %39 = vector.shape_cast %36 : vector<4x324xf32> to vector<1x4x324xf32>
    tpu.vector_store %arg9[%c0_26, %c0_27, %c0_28], %39 {strides = array<i32>} : memref<1x4x324xf32, #tpu.memory_space<vmem>>, vector<1x4x324xf32>,
    %c0_29 = arith.constant 0 : index
    %c1 = arith.constant 1 : index
    %40 = vector.load %arg10[%c0_29, %c1] : memref<8x362xbf16, #tpu.memory_space<vmem>>, vector<8x324xbf16>
    %c1_30 = arith.constant 1 : index
    %c0_31 = arith.constant 0 : index
    %c0_32 = arith.constant 0 : index
    %41 = vector.load %arg7[%c1_30, %c0_31, %c0_32] : memref<9x4x8xbf16, #tpu.memory_space<vmem>>, vector<1x4x8xbf16>
    %42 = vector.shape_cast %41 : vector<1x4x8xbf16> to vector<4x8xbf16>
    %cst_33 = arith.constant dense<0.000000e+00> : vector<4x324xf32>
    %43 = tpu.matmul %42, %40, %cst_33 {dimension_numbers = #tpu.dot_dimension_numbers<[1], [0], [0], [1], [0, 0, 1, 1], [], []>} : vector<4x8xbf16>, vector<8x324xbf16>, vector<4x324xf32> -> vector<4x324xf32>
    %c0_34 = arith.constant 0 : index
    %c0_35 = arith.constant 0 : index
    %c0_36 = arith.constant 0 : index
    %44 = vector.load %arg9[%c0_34, %c0_35, %c0_36] : memref<1x4x324xf32, #tpu.memory_space<vmem>>, vector<1x4x324xf32>
    %45 = vector.shape_cast %44 : vector<1x4x324xf32> to vector<4x324xf32>
    %46 = arith.addf %45, %43 : vector<4x324xf32>
    %c0_37 = arith.constant 0 : index
    %c0_38 = arith.constant 0 : index
    %c0_39 = arith.constant 0 : index
    %47 = vector.load %arg9[%c0_37, %c0_38, %c0_39] : memref<1x4x324xf32, #tpu.memory_space<vmem>>, vector<1x4x324xf32>
    %48 = vector.shape_cast %47 : vector<1x4x324xf32> to vector<4x324xf32>
    %49 = vector.shape_cast %46 : vector<4x324xf32> to vector<1x4x324xf32>
    tpu.vector_store %arg9[%c0_37, %c0_38, %c0_39], %49 {strides = array<i32>} : memref<1x4x324xf32, #tpu.memory_space<vmem>>, vector<1x4x324xf32>,
    %c0_40 = arith.constant 0 : index
    %c2 = arith.constant 2 : index
    %50 = vector.load %arg10[%c0_40, %c2] : memref<8x362xbf16, #tpu.memory_space<vmem>>, vector<8x324xbf16>
    %c2_41 = arith.constant 2 : index
    %c0_42 = arith.constant 0 : index
    %c0_43 = arith.constant 0 : index
    %51 = vector.load %arg7[%c2_41, %c0_42, %c0_43] : memref<9x4x8xbf16, #tpu.memory_space<vmem>>, vector<1x4x8xbf16>
    %52 = vector.shape_cast %51 : vector<1x4x8xbf16> to vector<4x8xbf16>
    %cst_44 = arith.constant dense<0.000000e+00> : vector<4x324xf32>
    %53 = tpu.matmul %52, %50, %cst_44 {dimension_numbers = #tpu.dot_dimension_numbers<[1], [0], [0], [1], [0, 0, 1, 1], [], []>} : vector<4x8xbf16>, vector<8x324xbf16>, vector<4x324xf32> -> vector<4x324xf32>
    %c0_45 = arith.constant 0 : index
    %c0_46 = arith.constant 0 : index
    %c0_47 = arith.constant 0 : index
    %54 = vector.load %arg9[%c0_45, %c0_46, %c0_47] : memref<1x4x324xf32, #tpu.memory_space<vmem>>, vector<1x4x324xf32>
    %55 = vector.shape_cast %54 : vector<1x4x324xf32> to vector<4x324xf32>
    %56 = arith.addf %55, %53 : vector<4x324xf32>
    %c0_48 = arith.constant 0 : index
    %c0_49 = arith.constant 0 : index
    %c0_50 = arith.constant 0 : index
    %57 = vector.load %arg9[%c0_48, %c0_49, %c0_50] : memref<1x4x324xf32, #tpu.memory_space<vmem>>, vector<1x4x324xf32>
    %58 = vector.shape_cast %57 : vector<1x4x324xf32> to vector<4x324xf32>
    %59 = vector.shape_cast %56 : vector<4x324xf32> to vector<1x4x324xf32>
    tpu.vector_store %arg9[%c0_48, %c0_49, %c0_50], %59 {strides = array<i32>} : memref<1x4x324xf32, #tpu.memory_space<vmem>>, vector<1x4x324xf32>,
    %c0_51 = arith.constant 0 : index
    %c18 = arith.constant 18 : index
    %60 = vector.load %arg10[%c0_51, %c18] : memref<8x362xbf16, #tpu.memory_space<vmem>>, vector<8x324xbf16>
    %c3 = arith.constant 3 : index
    %c0_52 = arith.constant 0 : index
    %c0_53 = arith.constant 0 : index
    %61 = vector.load %arg7[%c3, %c0_52, %c0_53] : memref<9x4x8xbf16, #tpu.memory_space<vmem>>, vector<1x4x8xbf16>
    %62 = vector.shape_cast %61 : vector<1x4x8xbf16> to vector<4x8xbf16>
    %cst_54 = arith.constant dense<0.000000e+00> : vector<4x324xf32>
    %63 = tpu.matmul %62, %60, %cst_54 {dimension_numbers = #tpu.dot_dimension_numbers<[1], [0], [0], [1], [0, 0, 1, 1], [], []>} : vector<4x8xbf16>, vector<8x324xbf16>, vector<4x324xf32> -> vector<4x324xf32>
    %c0_55 = arith.constant 0 : index
    %c0_56 = arith.constant 0 : index
    %c0_57 = arith.constant 0 : index
    %64 = vector.load %arg9[%c0_55, %c0_56, %c0_57] : memref<1x4x324xf32, #tpu.memory_space<vmem>>, vector<1x4x324xf32>
    %65 = vector.shape_cast %64 : vector<1x4x324xf32> to vector<4x324xf32>
    %66 = arith.addf %65, %63 : vector<4x324xf32>
    %c0_58 = arith.constant 0 : index
    %c0_59 = arith.constant 0 : index
    %c0_60 = arith.constant 0 : index
    %67 = vector.load %arg9[%c0_58, %c0_59, %c0_60] : memref<1x4x324xf32, #tpu.memory_space<vmem>>, vector<1x4x324xf32>
    %68 = vector.shape_cast %67 : vector<1x4x324xf32> to vector<4x324xf32>
    %69 = vector.shape_cast %66 : vector<4x324xf32> to vector<1x4x324xf32>
    tpu.vector_store %arg9[%c0_58, %c0_59, %c0_60], %69 {strides = array<i32>} : memref<1x4x324xf32, #tpu.memory_space<vmem>>, vector<1x4x324xf32>,
    %c0_61 = arith.constant 0 : index
    %c19_62 = arith.constant 19 : index
    %70 = vector.load %arg10[%c0_61, %c19_62] : memref<8x362xbf16, #tpu.memory_space<vmem>>, vector<8x324xbf16>
    %c4 = arith.constant 4 : index
    %c0_63 = arith.constant 0 : index
    %c0_64 = arith.constant 0 : index
    %71 = vector.load %arg7[%c4, %c0_63, %c0_64] : memref<9x4x8xbf16, #tpu.memory_space<vmem>>, vector<1x4x8xbf16>
    %72 = vector.shape_cast %71 : vector<1x4x8xbf16> to vector<4x8xbf16>
    %cst_65 = arith.constant dense<0.000000e+00> : vector<4x324xf32>
    %73 = tpu.matmul %72, %70, %cst_65 {dimension_numbers = #tpu.dot_dimension_numbers<[1], [0], [0], [1], [0, 0, 1, 1], [], []>} : vector<4x8xbf16>, vector<8x324xbf16>, vector<4x324xf32> -> vector<4x324xf32>
    %c0_66 = arith.constant 0 : index
    %c0_67 = arith.constant 0 : index
    %c0_68 = arith.constant 0 : index
    %74 = vector.load %arg9[%c0_66, %c0_67, %c0_68] : memref<1x4x324xf32, #tpu.memory_space<vmem>>, vector<1x4x324xf32>
    %75 = vector.shape_cast %74 : vector<1x4x324xf32> to vector<4x324xf32>
    %76 = arith.addf %75, %73 : vector<4x324xf32>
    %c0_69 = arith.constant 0 : index
    %c0_70 = arith.constant 0 : index
    %c0_71 = arith.constant 0 : index
    %77 = vector.load %arg9[%c0_69, %c0_70, %c0_71] : memref<1x4x324xf32, #tpu.memory_space<vmem>>, vector<1x4x324xf32>
    %78 = vector.shape_cast %77 : vector<1x4x324xf32> to vector<4x324xf32>
    %79 = vector.shape_cast %76 : vector<4x324xf32> to vector<1x4x324xf32>
    tpu.vector_store %arg9[%c0_69, %c0_70, %c0_71], %79 {strides = array<i32>} : memref<1x4x324xf32, #tpu.memory_space<vmem>>, vector<1x4x324xf32>,
    %c0_72 = arith.constant 0 : index
    %c20 = arith.constant 20 : index
    %80 = vector.load %arg10[%c0_72, %c20] : memref<8x362xbf16, #tpu.memory_space<vmem>>, vector<8x324xbf16>
    %c5 = arith.constant 5 : index
    %c0_73 = arith.constant 0 : index
    %c0_74 = arith.constant 0 : index
    %81 = vector.load %arg7[%c5, %c0_73, %c0_74] : memref<9x4x8xbf16, #tpu.memory_space<vmem>>, vector<1x4x8xbf16>
    %82 = vector.shape_cast %81 : vector<1x4x8xbf16> to vector<4x8xbf16>
    %cst_75 = arith.constant dense<0.000000e+00> : vector<4x324xf32>
    %83 = tpu.matmul %82, %80, %cst_75 {dimension_numbers = #tpu.dot_dimension_numbers<[1], [0], [0], [1], [0, 0, 1, 1], [], []>} : vector<4x8xbf16>, vector<8x324xbf16>, vector<4x324xf32> -> vector<4x324xf32>
    %c0_76 = arith.constant 0 : index
    %c0_77 = arith.constant 0 : index
    %c0_78 = arith.constant 0 : index
    %84 = vector.load %arg9[%c0_76, %c0_77, %c0_78] : memref<1x4x324xf32, #tpu.memory_space<vmem>>, vector<1x4x324xf32>
    %85 = vector.shape_cast %84 : vector<1x4x324xf32> to vector<4x324xf32>
    %86 = arith.addf %85, %83 : vector<4x324xf32>
    %c0_79 = arith.constant 0 : index
    %c0_80 = arith.constant 0 : index
    %c0_81 = arith.constant 0 : index
    %87 = vector.load %arg9[%c0_79, %c0_80, %c0_81] : memref<1x4x324xf32, #tpu.memory_space<vmem>>, vector<1x4x324xf32>
    %88 = vector.shape_cast %87 : vector<1x4x324xf32> to vector<4x324xf32>
    %89 = vector.shape_cast %86 : vector<4x324xf32> to vector<1x4x324xf32>
    tpu.vector_store %arg9[%c0_79, %c0_80, %c0_81], %89 {strides = array<i32>} : memref<1x4x324xf32, #tpu.memory_space<vmem>>, vector<1x4x324xf32>,
    %c0_82 = arith.constant 0 : index
    %c36 = arith.constant 36 : index
    %90 = vector.load %arg10[%c0_82, %c36] : memref<8x362xbf16, #tpu.memory_space<vmem>>, vector<8x324xbf16>
    %c6 = arith.constant 6 : index
    %c0_83 = arith.constant 0 : index
    %c0_84 = arith.constant 0 : index
    %91 = vector.load %arg7[%c6, %c0_83, %c0_84] : memref<9x4x8xbf16, #tpu.memory_space<vmem>>, vector<1x4x8xbf16>
    %92 = vector.shape_cast %91 : vector<1x4x8xbf16> to vector<4x8xbf16>
    %cst_85 = arith.constant dense<0.000000e+00> : vector<4x324xf32>
    %93 = tpu.matmul %92, %90, %cst_85 {dimension_numbers = #tpu.dot_dimension_numbers<[1], [0], [0], [1], [0, 0, 1, 1], [], []>} : vector<4x8xbf16>, vector<8x324xbf16>, vector<4x324xf32> -> vector<4x324xf32>
    %c0_86 = arith.constant 0 : index
    %c0_87 = arith.constant 0 : index
    %c0_88 = arith.constant 0 : index
    %94 = vector.load %arg9[%c0_86, %c0_87, %c0_88] : memref<1x4x324xf32, #tpu.memory_space<vmem>>, vector<1x4x324xf32>
    %95 = vector.shape_cast %94 : vector<1x4x324xf32> to vector<4x324xf32>
    %96 = arith.addf %95, %93 : vector<4x324xf32>
    %c0_89 = arith.constant 0 : index
    %c0_90 = arith.constant 0 : index
    %c0_91 = arith.constant 0 : index
    %97 = vector.load %arg9[%c0_89, %c0_90, %c0_91] : memref<1x4x324xf32, #tpu.memory_space<vmem>>, vector<1x4x324xf32>
    %98 = vector.shape_cast %97 : vector<1x4x324xf32> to vector<4x324xf32>
    %99 = vector.shape_cast %96 : vector<4x324xf32> to vector<1x4x324xf32>
    tpu.vector_store %arg9[%c0_89, %c0_90, %c0_91], %99 {strides = array<i32>} : memref<1x4x324xf32, #tpu.memory_space<vmem>>, vector<1x4x324xf32>,
    %c0_92 = arith.constant 0 : index
    %c37 = arith.constant 37 : index
    %100 = vector.load %arg10[%c0_92, %c37] : memref<8x362xbf16, #tpu.memory_space<vmem>>, vector<8x324xbf16>
    %c7 = arith.constant 7 : index
    %c0_93 = arith.constant 0 : index
    %c0_94 = arith.constant 0 : index
    %101 = vector.load %arg7[%c7, %c0_93, %c0_94] : memref<9x4x8xbf16, #tpu.memory_space<vmem>>, vector<1x4x8xbf16>
    %102 = vector.shape_cast %101 : vector<1x4x8xbf16> to vector<4x8xbf16>
    %cst_95 = arith.constant dense<0.000000e+00> : vector<4x324xf32>
    %103 = tpu.matmul %102, %100, %cst_95 {dimension_numbers = #tpu.dot_dimension_numbers<[1], [0], [0], [1], [0, 0, 1, 1], [], []>} : vector<4x8xbf16>, vector<8x324xbf16>, vector<4x324xf32> -> vector<4x324xf32>
    %c0_96 = arith.constant 0 : index
    %c0_97 = arith.constant 0 : index
    %c0_98 = arith.constant 0 : index
    %104 = vector.load %arg9[%c0_96, %c0_97, %c0_98] : memref<1x4x324xf32, #tpu.memory_space<vmem>>, vector<1x4x324xf32>
    %105 = vector.shape_cast %104 : vector<1x4x324xf32> to vector<4x324xf32>
    %106 = arith.addf %105, %103 : vector<4x324xf32>
    %c0_99 = arith.constant 0 : index
    %c0_100 = arith.constant 0 : index
    %c0_101 = arith.constant 0 : index
    %107 = vector.load %arg9[%c0_99, %c0_100, %c0_101] : memref<1x4x324xf32, #tpu.memory_space<vmem>>, vector<1x4x324xf32>
    %108 = vector.shape_cast %107 : vector<1x4x324xf32> to vector<4x324xf32>
    %109 = vector.shape_cast %106 : vector<4x324xf32> to vector<1x4x324xf32>
    tpu.vector_store %arg9[%c0_99, %c0_100, %c0_101], %109 {strides = array<i32>} : memref<1x4x324xf32, #tpu.memory_space<vmem>>, vector<1x4x324xf32>,
    %c0_102 = arith.constant 0 : index
    %c38 = arith.constant 38 : index
    %110 = vector.load %arg10[%c0_102, %c38] : memref<8x362xbf16, #tpu.memory_space<vmem>>, vector<8x324xbf16>
    %c8 = arith.constant 8 : index
    %c0_103 = arith.constant 0 : index
    %c0_104 = arith.constant 0 : index
    %111 = vector.load %arg7[%c8, %c0_103, %c0_104] : memref<9x4x8xbf16, #tpu.memory_space<vmem>>, vector<1x4x8xbf16>
    %112 = vector.shape_cast %111 : vector<1x4x8xbf16> to vector<4x8xbf16>
    %cst_105 = arith.constant dense<0.000000e+00> : vector<4x324xf32>
    %113 = tpu.matmul %112, %110, %cst_105 {dimension_numbers = #tpu.dot_dimension_numbers<[1], [0], [0], [1], [0, 0, 1, 1], [], []>} : vector<4x8xbf16>, vector<8x324xbf16>, vector<4x324xf32> -> vector<4x324xf32>
    %c0_106 = arith.constant 0 : index
    %c0_107 = arith.constant 0 : index
    %c0_108 = arith.constant 0 : index
    %114 = vector.load %arg9[%c0_106, %c0_107, %c0_108] : memref<1x4x324xf32, #tpu.memory_space<vmem>>, vector<1x4x324xf32>
    %115 = vector.shape_cast %114 : vector<1x4x324xf32> to vector<4x324xf32>
    %116 = arith.addf %115, %113 : vector<4x324xf32>
    %c0_109 = arith.constant 0 : index
    %c0_110 = arith.constant 0 : index
    %c0_111 = arith.constant 0 : index
    %117 = vector.load %arg9[%c0_109, %c0_110, %c0_111] : memref<1x4x324xf32, #tpu.memory_space<vmem>>, vector<1x4x324xf32>
    %118 = vector.shape_cast %117 : vector<1x4x324xf32> to vector<4x324xf32>
    %119 = vector.shape_cast %116 : vector<4x324xf32> to vector<1x4x324xf32>
    tpu.vector_store %arg9[%c0_109, %c0_110, %c0_111], %119 {strides = array<i32>} : memref<1x4x324xf32, #tpu.memory_space<vmem>>, vector<1x4x324xf32>,
    %c0_112 = arith.constant 0 : index
    %c0_113 = arith.constant 0 : index
    %120 = vector.load %arg8[%c0_112, %c0_113] : memref<1x324xf32, #tpu.memory_space<vmem>>, vector<1x324xf32>
    %cst_114 = arith.constant 5.000000e-01 : f32
    %121 = vector.broadcast %cst_114 : f32 to vector<1x324xf32>
    %122 = arith.cmpf ogt, %120, %121 : vector<1x324xf32>
    %c0_115 = arith.constant 0 : index
    %c0_116 = arith.constant 0 : index
    %c0_117 = arith.constant 0 : index
    %123 = vector.load %arg9[%c0_115, %c0_116, %c0_117] : memref<1x4x324xf32, #tpu.memory_space<vmem>>, vector<1x4x324xf32>
    %124 = vector.shape_cast %123 : vector<1x4x324xf32> to vector<4x324xf32>
    %cst_118 = arith.constant 0.000000e+00 : f32
    %125 = vector.shape_cast %122 : vector<1x324xi1> to vector<1x324xi1>
    %126 = vector.broadcast %125 : vector<1x324xi1> to vector<4x324xi1>
    %127 = vector.broadcast %cst_118 : f32 to vector<4x324xf32>
    %128 = arith.select %126, %124, %127 : vector<4x324xi1>, vector<4x324xf32>
    %c0_119 = arith.constant 0 : index
    %c0_120 = arith.constant 0 : index
    %c0_121 = arith.constant 0 : index
    %129 = vector.load %arg9[%c0_119, %c0_120, %c0_121] : memref<1x4x324xf32, #tpu.memory_space<vmem>>, vector<1x4x324xf32>
    %130 = vector.shape_cast %129 : vector<1x4x324xf32> to vector<4x324xf32>
    %131 = vector.shape_cast %128 : vector<4x324xf32> to vector<1x4x324xf32>
    tpu.vector_store %arg9[%c0_119, %c0_120, %c0_121], %131 {strides = array<i32>} : memref<1x4x324xf32, #tpu.memory_space<vmem>>, vector<1x4x324xf32>,
    return
  }
  func.func @transform_0(%arg0: i32) -> (i32, i32, i32) {
    %c0_i32 = arith.constant 0 : i32
    %c0_i32_0 = arith.constant 0 : i32
    %c0_i32_1 = arith.constant 0 : i32
    return %arg0, %c0_i32, %c0_i32_0 : i32, i32, i32
  }
  func.func @transform_1(%arg0: i32) -> (i32, i32) {
    %c0_i32 = arith.constant 0 : i32
    %c0_i32_0 = arith.constant 0 : i32
    %c0_i32_1 = arith.constant 0 : i32
    return %c0_i32, %c0_i32_0 : i32, i32
  }
  func.func @transform_2(%arg0: i32) -> (i32, i32) {
    %c0_i32 = arith.constant 0 : i32
    %c0_i32_0 = arith.constant 0 : i32
    %c0_i32_1 = arith.constant 0 : i32
    return %c0_i32, %c0_i32_0 : i32, i32
  }
  func.func @transform_3(%arg0: i32) -> (i32, i32) {
    %c0_i32 = arith.constant 0 : i32
    %c0_i32_0 = arith.constant 0 : i32
    %c0_i32_1 = arith.constant 0 : i32
    return %c0_i32, %c0_i32_0 : i32, i32
  }
  func.func @transform_4(%arg0: i32) -> (i32, i32) {
    %c0_i32 = arith.constant 0 : i32
    %c0_i32_0 = arith.constant 0 : i32
    %c0_i32_1 = arith.constant 0 : i32
    return %c0_i32, %c0_i32_0 : i32, i32
  }
  func.func @transform_5(%arg0: i32) -> (i32, i32) {
    %c0_i32 = arith.constant 0 : i32
    %c0_i32_0 = arith.constant 0 : i32
    %c0_i32_1 = arith.constant 0 : i32
    return %c0_i32, %c0_i32_0 : i32, i32
  }
  func.func @transform_6(%arg0: i32) -> (i32, i32, i32) {
    %c0_i32 = arith.constant 0 : i32
    %c0_i32_0 = arith.constant 0 : i32
    %c0_i32_1 = arith.constant 0 : i32
    %c0_i32_2 = arith.constant 0 : i32
    return %c0_i32, %c0_i32_0, %c0_i32_1 : i32, i32, i32
  }
  func.func @transform_7(%arg0: i32) -> (i32, i32) {
    %c0_i32 = arith.constant 0 : i32
    %c0_i32_0 = arith.constant 0 : i32
    %c0_i32_1 = arith.constant 0 : i32
    return %c0_i32, %c0_i32_0 : i32, i32
  }
  func.func @transform_8(%arg0: i32) -> (i32, i32, i32) {
    %c0_i32 = arith.constant 0 : i32
    %c0_i32_0 = arith.constant 0 : i32
    %c0_i32_1 = arith.constant 0 : i32
    return %arg0, %c0_i32, %c0_i32_0 : i32, i32, i32
  }
}

</mosaic_0001>

<llo_original>
// kernel: dense_block_forward.3
$region0: #{dense_block_forward.3}
  #allocation0 [shape = 'u32[]', space=smem, size = 0x4, offset = 0x4, fixed_abs, tag = 'smem constant byte address 0x4 - core index']
  #allocation1 [shape = 'u32[144,128]{1,0:T(1,128)}', space=vmem, size = 0x12000, scoped, tag = 'internal scratch']
  #allocation2 [shape = 'bf16[8,362]{1,0:T(8,128)(2,1)}', space=vmem, size = 0x1800, scoped, tag = 'scratch operand']
  %s0 = inlined_call_operand.vmem [shape: f32[2,20,324], index: 0, kind: input, shape index: {}]
  %s1 = inlined_call_operand.vmem [shape: f32[20,1], index: 1, kind: input, shape index: {}]
  %s2 = inlined_call_operand.vmem [shape: f32[20,1], index: 2, kind: input, shape index: {}]
  %s3 = inlined_call_operand.vmem [shape: bf16[8,20], index: 3, kind: input, shape index: {}]
  %s4 = inlined_call_operand.vmem [shape: f32[8,1], index: 4, kind: input, shape index: {}]
  %s5 = inlined_call_operand.vmem [shape: f32[8,1], index: 5, kind: input, shape index: {}]
  %s6 = inlined_call_operand.vmem [shape: bf16[9,4,8], index: 6, kind: input, shape index: {}]
  %s7 = inlined_call_operand.vmem [shape: f32[1,324], index: 7, kind: input, shape index: {}]
  %s8 = inlined_call_operand.vmem [shape: f32[2,4,324], index: 8, kind: output, shape index: {}]
  %s9 = sld [smem:[#allocation0]]
  $region69: #{dense_block_forward.3} parent=0
    _
  %s11 = ssub.s32 1, %s9
  %s12 = scalar_select 0, %s11, %s9
  loop: start=0, step=1, limit=4
  $region2: #{dense_block_forward.3} parent=0 // loop_pre_header
    _
  $region3: #{dense_block_forward.3} parent=0 // loop_header
    %s14 = sphi 0, %s18
    %p15 = scmp.ge.s32.totalorder %s14, 4
    %s24 = sphi 0, %s26
    %s27 = sphi 0, %s24
    %s28 = sphi 0, %s27
    %s44 = sphi 0, %s28
    %s48 = sphi 0, %s48
    %s50 = sphi 0, %s48
    %s51 = sphi 0, %s50
    %s65 = sphi 0, %s51
    %s69 = sphi 0, %s69
    %s71 = sphi 0, %s69
    %s72 = sphi 0, %s71
    %s86 = sphi 0, %s72
    %s90 = sphi 0, %s90
    %s92 = sphi 0, %s90
    %s93 = sphi 0, %s92
    %s107 = sphi 0, %s93
    %s111 = sphi 0, %s111
    %s113 = sphi 0, %s111
    %s114 = sphi 0, %s113
    %s128 = sphi 0, %s114
    %s132 = sphi 0, %s132
    %s134 = sphi 0, %s132
    %s135 = sphi 0, %s134
    %s149 = sphi 0, %s135
    %s153 = sphi 0, %s153
    %s155 = sphi 0, %s153
    %s156 = sphi 0, %s155
    %s170 = sphi 0, %s156
    %s174 = sphi 0, %s174
    %s176 = sphi 0, %s174
    %s177 = sphi 0, %s176
    %s191 = sphi 0, %s177
    %s197 = sphi 0, %s199
    %s200 = sphi 0, %s197
    %s201 = sphi 0, %s200
    %s217 = sphi 0, %s201
  $region4: #{dense_block_forward.3} parent=0 // loop_header_branch
    %17 = sbr.rel (%p15) target = $region8
  $region5: #{dense_block_forward.3} parent=0 // loop_body
    %s19 = ssub.s32 %s14, 1
    %s20 = ssub.s32 %s14, 2
    %s21 = sadd.s32 %s14, 1
    %s22 = ssub.s32 %s14, %s21
    %p23 = scmp.eq.s32.totalorder %s22, 0
    %s25 = sadd.s32 %s24, 1
    %s26 = scalar_select %p23, %s24, %s25
    %p29 = pneg %p23
    %p30 = scmp.eq.s32.totalorder %s14, 1
    %p31 = por %p29, %p30
    %p32 = scmp.ne.s32.totalorder %s24, %s27
    %p33 = scmp.eq.s32.totalorder %s14, 0
    %p34 = por %p32, %p33
    %p35 = scmp.ne.s32.totalorder %s24, %s27
    %p36 = scmp.eq.s32.totalorder %s19, 1
    %p37 = por %p35, %p36
    %p38 = scmp.ne.s32.totalorder %s27, %s28
    %p39 = scmp.eq.s32.totalorder %s19, 0
    %p40 = por %p38, %p39
    %p41 = scmp.ne.s32.totalorder %s27, %s28
    %p42 = scmp.eq.s32.totalorder %s20, 1
    %p43 = por %p41, %p42
    %p45 = scmp.ne.s32.totalorder %s28, %s44
    %p46 = scmp.eq.s32.totalorder %s20, 0
    %p47 = por %p45, %p46
    %s49 = sadd.s32 %s48, 1
    %p52 = scmp.eq.s32.totalorder %s14, 1
    %p53 = scmp.ne.s32.totalorder %s48, %s50
    %p54 = scmp.eq.s32.totalorder %s14, 0
    %p55 = por %p53, %p54
    %p56 = scmp.ne.s32.totalorder %s48, %s50
    %p57 = scmp.eq.s32.totalorder %s19, 1
    %p58 = por %p56, %p57
    %p59 = scmp.ne.s32.totalorder %s50, %s51
    %p60 = scmp.eq.s32.totalorder %s19, 0
    %p61 = por %p59, %p60
    %p62 = scmp.ne.s32.totalorder %s50, %s51
    %p63 = scmp.eq.s32.totalorder %s20, 1
    %p64 = por %p62, %p63
    %p66 = scmp.ne.s32.totalorder %s51, %s65
    %p67 = scmp.eq.s32.totalorder %s20, 0
    %p68 = por %p66, %p67
    %s70 = sadd.s32 %s69, 1
    %p73 = scmp.eq.s32.totalorder %s14, 1
    %p74 = scmp.ne.s32.totalorder %s69, %s71
    %p75 = scmp.eq.s32.totalorder %s14, 0
    %p76 = por %p74, %p75
    %p77 = scmp.ne.s32.totalorder %s69, %s71
    %p78 = scmp.eq.s32.totalorder %s19, 1
    %p79 = por %p77, %p78
    %p80 = scmp.ne.s32.totalorder %s71, %s72
    %p81 = scmp.eq.s32.totalorder %s19, 0
    %p82 = por %p80, %p81
    %p83 = scmp.ne.s32.totalorder %s71, %s72
    %p84 = scmp.eq.s32.totalorder %s20, 1
    %p85 = por %p83, %p84
    %p87 = scmp.ne.s32.totalorder %s72, %s86
    %p88 = scmp.eq.s32.totalorder %s20, 0
    %p89 = por %p87, %p88
    %s91 = sadd.s32 %s90, 1
    %p94 = scmp.eq.s32.totalorder %s14, 1
    %p95 = scmp.ne.s32.totalorder %s90, %s92
    %p96 = scmp.eq.s32.totalorder %s14, 0
    %p97 = por %p95, %p96
    %p98 = scmp.ne.s32.totalorder %s90, %s92
    %p99 = scmp.eq.s32.totalorder %s19, 1
    %p100 = por %p98, %p99
    %p101 = scmp.ne.s32.totalorder %s92, %s93
    %p102 = scmp.eq.s32.totalorder %s19, 0
    %p103 = por %p101, %p102
    %p104 = scmp.ne.s32.totalorder %s92, %s93
    %p105 = scmp.eq.s32.totalorder %s20, 1
    %p106 = por %p104, %p105
    %p108 = scmp.ne.s32.totalorder %s93, %s107
    %p109 = scmp.eq.s32.totalorder %s20, 0
    %p110 = por %p108, %p109
    %s112 = sadd.s32 %s111, 1
    %p115 = scmp.eq.s32.totalorder %s14, 1
    %p116 = scmp.ne.s32.totalorder %s111, %s113
    %p117 = scmp.eq.s32.totalorder %s14, 0
    %p118 = por %p116, %p117
    %p119 = scmp.ne.s32.totalorder %s111, %s113
    %p120 = scmp.eq.s32.totalorder %s19, 1
    %p121 = por %p119, %p120
    %p122 = scmp.ne.s32.totalorder %s113, %s114
    %p123 = scmp.eq.s32.totalorder %s19, 0
    %p124 = por %p122, %p123
    %p125 = scmp.ne.s32.totalorder %s113, %s114
    %p126 = scmp.eq.s32.totalorder %s20, 1
    %p127 = por %p125, %p126
    %p129 = scmp.ne.s32.totalorder %s114, %s128
    %p130 = scmp.eq.s32.totalorder %s20, 0
    %p131 = por %p129, %p130
    %s133 = sadd.s32 %s132, 1
    %p136 = scmp.eq.s32.totalorder %s14, 1
    %p137 = scmp.ne.s32.totalorder %s132, %s134
    %p138 = scmp.eq.s32.totalorder %s14, 0
    %p139 = por %p137, %p138
    %p140 = scmp.ne.s32.totalorder %s132, %s134
    %p141 = scmp.eq.s32.totalorder %s19, 1
    %p142 = por %p140, %p141
    %p143 = scmp.ne.s32.totalorder %s134, %s135
    %p144 = scmp.eq.s32.totalorder %s19, 0
    %p145 = por %p143, %p144
    %p146 = scmp.ne.s32.totalorder %s134, %s135
    %p147 = scmp.eq.s32.totalorder %s20, 1
    %p148 = por %p146, %p147
    %p150 = scmp.ne.s32.totalorder %s135, %s149
    %p151 = scmp.eq.s32.totalorder %s20, 0
    %p152 = por %p150, %p151
    %s154 = sadd.s32 %s153, 1
    %p157 = scmp.eq.s32.totalorder %s14, 1
    %p158 = scmp.ne.s32.totalorder %s153, %s155
    %p159 = scmp.eq.s32.totalorder %s14, 0
    %p160 = por %p158, %p159
    %p161 = scmp.ne.s32.totalorder %s153, %s155
    %p162 = scmp.eq.s32.totalorder %s19, 1
    %p163 = por %p161, %p162
    %p164 = scmp.ne.s32.totalorder %s155, %s156
    %p165 = scmp.eq.s32.totalorder %s19, 0
    %p166 = por %p164, %p165
    %p167 = scmp.ne.s32.totalorder %s155, %s156
    %p168 = scmp.eq.s32.totalorder %s20, 1
    %p169 = por %p167, %p168
    %p171 = scmp.ne.s32.totalorder %s156, %s170
    %p172 = scmp.eq.s32.totalorder %s20, 0
    %p173 = por %p171, %p172
    %s175 = sadd.s32 %s174, 1
    %p178 = scmp.eq.s32.totalorder %s14, 1
    %p179 = scmp.ne.s32.totalorder %s174, %s176
    %p180 = scmp.eq.s32.totalorder %s14, 0
    %p181 = por %p179, %p180
    %p182 = scmp.ne.s32.totalorder %s174, %s176
    %p183 = scmp.eq.s32.totalorder %s19, 1
    %p184 = por %p182, %p183
    %p185 = scmp.ne.s32.totalorder %s176, %s177
    %p186 = scmp.eq.s32.totalorder %s19, 0
    %p187 = por %p185, %p186
    %p188 = scmp.ne.s32.totalorder %s176, %s177
    %p189 = scmp.eq.s32.totalorder %s20, 1
    %p190 = por %p188, %p189
    %p192 = scmp.ne.s32.totalorder %s177, %s191
    %p193 = scmp.eq.s32.totalorder %s20, 0
    %p194 = por %p192, %p193
    %s195 = ssub.s32 %s14, %s21
    %p196 = scmp.eq.s32.totalorder %s195, 0
    %s198 = sadd.s32 %s197, 1
    %s199 = scalar_select %p196, %s197, %s198
    %p202 = pneg %p196
    %p203 = scmp.eq.s32.totalorder %s14, 1
    %p204 = por %p202, %p203
    %p205 = scmp.ne.s32.totalorder %s197, %s200
    %p206 = scmp.eq.s32.totalorder %s14, 0
    %p207 = por %p205, %p206
    %p208 = scmp.ne.s32.totalorder %s197, %s200
    %p209 = scmp.eq.s32.totalorder %s19, 1
    %p210 = por %p208, %p209
    %p211 = scmp.ne.s32.totalorder %s200, %s201
    %p212 = scmp.eq.s32.totalorder %s19, 0
    %p213 = por %p211, %p212
    %p214 = scmp.ne.s32.totalorder %s200, %s201
    %p215 = scmp.eq.s32.totalorder %s20, 1
    %p216 = por %p214, %p215
    %p218 = scmp.ne.s32.totalorder %s201, %s217
    %p219 = scmp.eq.s32.totalorder %s20, 0
    %p220 = por %p218, %p219
    %p221 = scmp.le.s32.totalorder 1, %s14
    %p222 = scmp.lt.s32.totalorder %s14, 3
    %p223 = pnand %p221, %p222
    %p224 = pneg %p223
    // Predicated region
    $region9: #{dense_block_forward.3} parent=5 // pred_check
      _
    $region10: #{dense_block_forward.3} parent=5 // pred_check_branch
      %226 = sbr.rel (%p223) target = $region12
    $region11: #{dense_block_forward.3} parent=5 // pred_region
      %s227 = ssub.s32 %s14, 1
      // Predicated region
      $region13: #{dense_block_forward.3} parent=11 // pred_check
        %p228 = pneg %p61
      $region14: #{dense_block_forward.3} parent=11 // pred_check_branch
        %230 = sbr.rel (%p228) target = $region16
      $region15: #{dense_block_forward.3} parent=11 // pred_region
        _
      $region16: #{dense_block_forward.3} parent=11 // pred_fallthru
        _
      // Predicated region
      $region17: #{dense_block_forward.3} parent=11 // pred_check
        %p231 = pneg %p82
      $region18: #{dense_block_forward.3} parent=11 // pred_check_branch
        %233 = sbr.rel (%p231) target = $region20
      $region19: #{dense_block_forward.3} parent=11 // pred_region
        _
      $region20: #{dense_block_forward.3} parent=11 // pred_fallthru
        _
      // Predicated region
      $region21: #{dense_block_forward.3} parent=11 // pred_check
        %p234 = pneg %p103
      $region22: #{dense_block_forward.3} parent=11 // pred_check_branch
        %236 = sbr.rel (%p234) target = $region24
      $region23: #{dense_block_forward.3} parent=11 // pred_region
        _
      $region24: #{dense_block_forward.3} parent=11 // pred_fallthru
        _
      // Predicated region
      $region25: #{dense_block_forward.3} parent=11 // pred_check
        %p237 = pneg %p124
      $region26: #{dense_block_forward.3} parent=11 // pred_check_branch
        %239 = sbr.rel (%p237) target = $region28
      $region27: #{dense_block_forward.3} parent=11 // pred_region
        _
      $region28: #{dense_block_forward.3} parent=11 // pred_fallthru
        _
      // Predicated region
      $region29: #{dense_block_forward.3} parent=11 // pred_check
        %p240 = pneg %p145
      $region30: #{dense_block_forward.3} parent=11 // pred_check_branch
        %242 = sbr.rel (%p240) target = $region32
      $region31: #{dense_block_forward.3} parent=11 // pred_region
        _
      $region32: #{dense_block_forward.3} parent=11 // pred_fallthru
        _
      // Predicated region
      $region33: #{dense_block_forward.3} parent=11 // pred_check
        %p243 = pneg %p166
      $region34: #{dense_block_forward.3} parent=11 // pred_check_branch
        %245 = sbr.rel (%p243) target = $region36
      $region35: #{dense_block_forward.3} parent=11 // pred_region
        _
      $region36: #{dense_block_forward.3} parent=11 // pred_fallthru
        _
      // Predicated region
      $region37: #{dense_block_forward.3} parent=11 // pred_check
        %p246 = pneg %p187
      $region38: #{dense_block_forward.3} parent=11 // pred_check_branch
        %248 = sbr.rel (%p246) target = $region40
      $region39: #{dense_block_forward.3} parent=11 // pred_region
        _
      $region40: #{dense_block_forward.3} parent=11 // pred_fallthru
        _
    $region12: #{dense_block_forward.3} parent=5 // pred_fallthru
      _
    %p249 = scmp.lt.s32.totalorder %s14, 2
    // Predicated region
    $region41: #{dense_block_forward.3} parent=5 // pred_check
      %p250 = pneg %p249
    $region42: #{dense_block_forward.3} parent=5 // pred_check_branch
      %252 = sbr.rel (%p250) target = $region44
    $region43: #{dense_block_forward.3} parent=5 // pred_region
      // Predicated region
      $region45: #{dense_block_forward.3} parent=43 // pred_check
        %p253 = pneg %p34
      $region46: #{dense_block_forward.3} parent=43 // pred_check_branch
        %255 = sbr.rel (%p253) target = $region48
      $region47: #{dense_block_forward.3} parent=43 // pred_region
        %p256 = scmp.lt.s32.totalorder %s14, 1
        %s257 = scalar_select %p256, %s14, 1
        %s258 = smul.addr %s257, 9
        %s259 = smul.addr %s258, 8
        %s260 = scalar_lea.vmem %s0, %s259
      $region48: #{dense_block_forward.3} parent=43 // pred_fallthru
        _
    $region44: #{dense_block_forward.3} parent=5 // pred_fallthru
      _
    %p261 = scmp.le.s32.totalorder 1, %s14
    %p262 = scmp.lt.s32.totalorder %s14, 3
    %p263 = pnand %p261, %p262
    %p264 = pneg %p263
    // Predicated region
    $region49: #{dense_block_forward.3} parent=5 // pred_check
      _
    $region50: #{dense_block_forward.3} parent=5 // pred_check_branch
      %266 = sbr.rel (%p263) target = $region52
    $region51: #{dense_block_forward.3} parent=5 // pred_region
      %s267 = ssub.s32 %s14, 1
      %p268 = scmp.lt.s32.totalorder %s19, 1
      %s269 = scalar_select %p268, %s19, 1
      %s270 = smul.addr %s269, 9
      %s271 = smul.addr %s270, 8
      %s272 = scalar_lea.vmem %s0, %s271
      %p273 = pneg %p40
      %p274 = pneg %p37
      %p275 = pneg %p61
      %p276 = pneg %p58
      %p277 = pneg %p82
      %p278 = pneg %p79
      %p279 = pneg %p103
      %p280 = pneg %p100
      %p281 = pneg %p124
      %p282 = pneg %p121
      %p283 = pneg %p145
      %p284 = pneg %p142
      %p285 = pneg %p166
      %p286 = pneg %p163
      %p287 = pneg %p187
      %p288 = pneg %p184
      %p289 = pneg %p213
      %p290 = pneg %p210
      %p291 = scmp.lt.s32.totalorder %s19, 1
      %s292 = scalar_select %p291, %s19, 1
      %s293 = smul.addr %s292, 3
      %s294 = smul.addr %s293, 4
      %s295 = scalar_lea.vmem %s8, %s294
      %p296 = scmp.lt.s32.totalorder %s19, 1
      %s297 = scalar_select %p296, %s19, 1
      %s298 = smul.addr %s297, 9
      %s299 = smul.addr %s298, 8
      %s300 = scalar_lea.vmem %s0, %s299
      %p301 = scmp.lt.s32.totalorder %s19, 1
      %s302 = scalar_select %p301, %s19, 1
      %s303 = smul.addr %s302, 3
      %s304 = smul.addr %s303, 4
      %s305 = scalar_lea.vmem %s8, %s304
      %v307 = vld [vmem:[%s300] sm:$0xff]
      %v308 = vld [vmem:[%s300 + $0x8] sm:$0xff]
      %v309 = vld [vmem:[%s300 + $0x10] sm:$0xff]
      %v310 = vld [vmem:[%s300 + $0x18] sm:$0xff]
      %v311 = vld [vmem:[%s300 + $0x20] sm:$0xff]
      %v312 = vld [vmem:[%s300 + $0x28] sm:$0xff]
      %v313 = vld [vmem:[%s300 + $0x30] sm:$0xf]
      %v314 = vld [vmem:[%s300 + $0x38] sm:$0xf]
      %v315 = vld [vmem:[%s300 + $0x40] sm:$0xf]
      %v316 = vld [vmem:[%s1] sm:$0xff]
      %v317 = vld [vmem:[%s1 + $0x8] sm:$0xff]
      %v318 = vld [vmem:[%s1 + $0x10] sm:$0xf]
      %320 = vset.pattern.permute.xlu0 0
      %321 = vperm.xlu0 %320, %v316
      %v322 = vpop.permute.xlu0 %321
      %325 = vset.pattern.permute.xlu0 0
      %326 = vperm.xlu0 %325, %v317
      %v327 = vpop.permute.xlu0 %326
      %330 = vset.pattern.permute.xlu0 0
      %331 = vperm.xlu0 %330, %v318
      %v332 = vpop.permute.xlu0 %331
      %v334 = vmul.f32 %v307, %v322
      %v335 = vmul.f32 %v308, %v322
      %v336 = vmul.f32 %v309, %v322
      %v337 = vmul.f32 %v310, %v327
      %v338 = vmul.f32 %v311, %v327
      %v339 = vmul.f32 %v312, %v327
      %v340 = vmul.f32 %v313, %v332
      %v341 = vmul.f32 %v314, %v332
      %v342 = vmul.f32 %v315, %v332
      %v343 = vld [vmem:[%s2] sm:$0xff]
      %v344 = vld [vmem:[%s2 + $0x8] sm:$0xff]
      %v345 = vld [vmem:[%s2 + $0x10] sm:$0xf]
      %347 = vset.pattern.permute.xlu0 0
      %348 = vperm.xlu0 %347, %v343
      %v349 = vpop.permute.xlu0 %348
      %352 = vset.pattern.permute.xlu0 0
      %353 = vperm.xlu0 %352, %v344
      %v354 = vpop.permute.xlu0 %353
      %357 = vset.pattern.permute.xlu0 0
      %358 = vperm.xlu0 %357, %v345
      %v359 = vpop.permute.xlu0 %358
      %v361 = vadd.f32 %v334, %v349
      %v362 = vadd.f32 %v335, %v349
      %v363 = vadd.f32 %v336, %v349
      %v364 = vadd.f32 %v337, %v354
      %v365 = vadd.f32 %v338, %v354
      %v366 = vadd.f32 %v339, %v354
      %v367 = vadd.f32 %v340, %v359
      %v368 = vadd.f32 %v341, %v359
      %v369 = vadd.f32 %v342, %v359
      %v370 = vmax.f32 %v361, 0.0
      %v371 = vmax.f32 %v362, 0.0
      %v372 = vmax.f32 %v363, 0.0
      %v373 = vmax.f32 %v364, 0.0
      %v374 = vmax.f32 %v365, 0.0
      %v375 = vmax.f32 %v366, 0.0
      %v376 = vmax.f32 %v367, 0.0
      %v377 = vmax.f32 %v368, 0.0
      %v378 = vmax.f32 %v369, 0.0
      %v379 = vld [vmem:[%s3] sm:$0xf]
      %v380 = vpack.c.bf16 %v373, %v370
      %v381 = vpack.c.bf16 %v374, %v371
      %v382 = vpack.c.bf16 %v375, %v372
      %v383 = vpack.c.bf16 %v376, %v376
      %v384 = vpack.c.bf16 %v377, %v377
      %v385 = vpack.c.bf16 %v378, %v378
      %vm386 = vcmask 162816
      %v388 = vsel %vm386, %v379, 0
      %vm390 = vcmask 1041408
      %v392 = vsel %vm390, %v383, 0
      %v395 = vsel %vm390, %v384, 0
      %v398 = vsel %vm390, %v385, 0
      %400 = vmatprep.subr.bf16.mxu0 %v381
      %401 = vmatpush1.bf16.msra.mxu0 %v380
      %402 = vmatprep.subr.bf16.mxu0 %v395
      %403 = vmatpush1.bf16.msra.mxu0 %v392
      %404 = vmatprep.subr.bf16.mxu0 0
      %405 = vmatpush1.bf16.msra.mxu0 0
      %406 = vmatprep.subr.bf16.mxu0 0
      %407 = vmatpush1.bf16.msra.mxu0 0
      %408 = vmatprep.subr.bf16.mxu0 0
      %409 = vmatpush1.bf16.msra.mxu0 0
      %410 = vmatprep.subr.bf16.mxu0 0
      %411 = vmatpush1.bf16.msra.mxu0 0
      %412 = vmatprep.subr.bf16.mxu0 0
      %413 = vmatpush1.bf16.msra.mxu0 0
      %414 = vmatprep.subr.bf16.mxu0 0
      %415 = vmatpush1.bf16.msra.mxu0 0
      %416 = vmatprep.subr.bf16.mxu0 0
      %417 = vmatpush1.bf16.msra.mxu0 0
      %418 = vmatprep.subr.bf16.mxu0 0
      %419 = vmatpush1.bf16.msra.mxu0 0
      %420 = vmatprep.subr.bf16.mxu0 0
      %421 = vmatpush1.bf16.msra.mxu0 0
      %422 = vmatprep.subr.bf16.mxu0 0
      %423 = vmatpush1.bf16.msra.mxu0 0
      %424 = vmatprep.subr.bf16.mxu0 0
      %425 = vmatpush1.bf16.msra.mxu0 0
      %426 = vmatprep.subr.bf16.mxu0 0
      %427 = vmatpush1.bf16.msra.mxu0 0
      %428 = vmatprep.subr.bf16.mxu0 0
      %429 = vmatpush1.bf16.msra.mxu0 0
      %430 = vmatprep.subr.bf16.mxu0 0
      %431 = vmatpush1.bf16.msra.mxu0 0
      %432 = vmatprep.mubr.bf16.mxu0 0
      %433 = vmatmul.mubr.bf16.gmra.mrb[0].mxu0 %v388
      %v434 = vpop.f32.mrb[0].mxu0
      %v435 = vadd.f32 0.0, %v434
      %v436 = vpop.f32.mrb[0].mxu0
      %v437 = vadd.f32 0.0, %v436
      %v438 = vpop.f32.mrb[0].mxu0
      %v439 = vpop.f32.mrb[0].mxu0
      %440 = vdwg.mxu0
      %441 = vmatprep.subr.bf16.mxu0 0
      %442 = vmatpush1.bf16.msra.mxu0 %v382
      %443 = vmatprep.subr.bf16.mxu0 0
      %444 = vmatpush1.bf16.msra.mxu0 %v398
      %445 = vmatprep.subr.bf16.mxu0 0
      %446 = vmatpush1.bf16.msra.mxu0 0
      %447 = vmatprep.subr.bf16.mxu0 0
      %448 = vmatpush1.bf16.msra.mxu0 0
      %449 = vmatprep.subr.bf16.mxu0 0
      %450 = vmatpush1.bf16.msra.mxu0 0
      %451 = vmatprep.subr.bf16.mxu0 0
      %452 = vmatpush1.bf16.msra.mxu0 0
      %453 = vmatprep.subr.bf16.mxu0 0
      %454 = vmatpush1.bf16.msra.mxu0 0
      %455 = vmatprep.subr.bf16.mxu0 0
      %456 = vmatpush1.bf16.msra.mxu0 0
      %457 = vmatprep.subr.bf16.mxu0 0
      %458 = vmatpush1.bf16.msra.mxu0 0
      %459 = vmatprep.subr.bf16.mxu0 0
      %460 = vmatpush1.bf16.msra.mxu0 0
      %461 = vmatprep.subr.bf16.mxu0 0
      %462 = vmatpush1.bf16.msra.mxu0 0
      %463 = vmatprep.subr.bf16.mxu0 0
      %464 = vmatpush1.bf16.msra.mxu0 0
      %465 = vmatprep.subr.bf16.mxu0 0
      %466 = vmatpush1.bf16.msra.mxu0 0
      %467 = vmatprep.subr.bf16.mxu0 0
      %468 = vmatpush1.bf16.msra.mxu0 0
      %469 = vmatprep.subr.bf16.mxu0 0
      %470 = vmatpush1.bf16.msra.mxu0 0
      %471 = vmatprep.subr.bf16.mxu0 0
      %472 = vmatpush1.bf16.msra.mxu0 0
      %473 = vmatprep.mubr.bf16.mxu0 0
      %474 = vmatmul.mubr.bf16.gmra.mrb[0].mxu0 %v388
      %v475 = vpop.f32.mrb[0].mxu0
      %v476 = vadd.f32 0.0, %v475
      %v477 = vpop.f32.mrb[0].mxu0
      %v478 = vpop.f32.mrb[0].mxu0
      %v479 = vpop.f32.mrb[0].mxu0
      %480 = vdwg.mxu0
      %v481 = vld [vmem:[%s4] sm:$0xff]
      %483 = vset.pattern.permute.xlu0 0
      %484 = vperm.xlu0 %483, %v481
      %v485 = vpop.permute.xlu0 %484
      %v487 = vmul.f32 %v435, %v485
      %v488 = vmul.f32 %v437, %v485
      %v489 = vmul.f32 %v476, %v485
      %v490 = vld [vmem:[%s5] sm:$0xff]
      %492 = vset.pattern.permute.xlu0 0
      %493 = vperm.xlu0 %492, %v490
      %v494 = vpop.permute.xlu0 %493
      %v496 = vadd.f32 %v487, %v494
      %v497 = vadd.f32 %v488, %v494
      %v498 = vadd.f32 %v489, %v494
      %v499 = vmax.f32 %v496, 0.0
      %v500 = vmax.f32 %v497, 0.0
      %v501 = vmax.f32 %v498, 0.0
      %v502 = vld [vmem:[%s7] sm:$0x7]
      %vm503 = vcmp.gt.f32.partialorder %v502, 0.5
      %v504 = vsel %vm503, 1, 0
      %v505 = vlaneseq
      %v506 = vshrl.u32 %v505, 7
      %v507 = vsub.s32 0, %v506
      %v508 = vrot.slane %v504, %v507
      %v509 = vlaneseq
      %v510 = vshrl.u32 %v509, 7
      %v511 = vsub.s32 1, %v510
      %v512 = vrot.slane %v504, %v511
      %v513 = vlaneseq
      %v514 = vshrl.u32 %v513, 7
      %v515 = vsub.s32 2, %v514
      %v516 = vrot.slane %v504, %v515
      %vm517 = vcmp.eq.s32.totalorder %v508, 1
      %vm518 = vcmp.eq.s32.totalorder %v512, 1
      %vm519 = vcmp.eq.s32.totalorder %v516, 1
      %v520 = vsel %vm517, %v499, 0.0
      %v521 = vsel %vm518, %v500, 0.0
      %v522 = vsel %vm519, %v501, 0.0
      %p523 = scmp.eq.s32.totalorder %s19, 0
      // Predicated region
      $region53: #{dense_block_forward.3} parent=51 // pred_check
        %p524 = pneg %p523
      $region54: #{dense_block_forward.3} parent=51 // pred_check_branch
        %526 = sbr.rel (%p524) target = $region56
      $region55: #{dense_block_forward.3} parent=51 // pred_region
        %527 = vst [vmem:[#allocation2] sm:$0xff] 0
        %vm528 = vcmask 863232
        %529 = vst.msk [vmem:[#allocation2 + $0x8] sm:$0xf] %vm528, 0
      $region56: #{dense_block_forward.3} parent=51 // pred_fallthru
        _
      %v530 = vpack.c.bf16 %v520, %v520
      %v531 = vpack.c.bf16 %v521, %v521
      %v532 = vpack.c.bf16 %v522, %v522
      %v536 = vunpack.c.l.b16 %v530
      %v537 = vunpack.c.l.b16 %v531
      %v538 = vunpack.c.l.b16 %v532
      %v539 = vpack.c.b16 %v537, %v536
      %v540 = vpack.c.b16 %v538, %v538
      %541 = vrot.lane.b32.xlu0 %v539, 19
      %v542 = vpop.permute.xlu0 %541
      %543 = vrot.lane.b32.xlu0 %v540, 19
      %v544 = vpop.permute.xlu0 %543
      %v545 = vrot.slane %v542, 4
      %vm546 = vcmask 154624
      %v547 = vsel %vm546, %v545, %v542
      %v548 = vsel %vm546, %v545, %v544
      %vm551 = vcmask 1043608
      %vm552 = vcmask 1047556
      %vm553 = vmor %vm552, %vm551
      %554 = vst.msk [vmem:[#allocation2] sm:$0xff] %vm553, %v547
      %vm555 = vcmask 707584
      %556 = vst.msk [vmem:[#allocation2 + $0x8] sm:$0xf] %vm555, %v548
      %v557 = vld [vmem:[#allocation2] sm:$0xff]
      %v558 = vld [vmem:[#allocation2 + $0x8] sm:$0xf]
      %v559 = vld [vmem:[%s6] sm:$0x3]
      %v562 = vunpack.c.l.b16 %v557
      %v563 = vunpack.c.h.b16 %v557
      %v564 = vunpack.c.l.b16 %v558
      %v565 = vpack.c.b16 %v562, %v562
      %v566 = vpack.c.b16 %v563, %v563
      %v567 = vpack.c.b16 %v564, %v564
      %vm568 = vcmask 64512
      %v570 = vsel %vm568, %v559, 0
      %vm572 = vcmask 1043456
      %v574 = vsel %vm572, %v565, 0
      %v577 = vsel %vm572, %v566, 0
      %v580 = vsel %vm572, %v567, 0
      %582 = vmatprep.subr.bf16.mxu0 %v577
      %583 = vmatpush1.bf16.msra.mxu0 %v574
      %584 = vmatprep.subr.bf16.mxu0 0
      %585 = vmatpush1.bf16.msra.mxu0 0
      %586 = vmatprep.subr.bf16.mxu0 0
      %587 = vmatpush1.bf16.msra.mxu0 0
      %588 = vmatprep.subr.bf16.mxu0 0
      %589 = vmatpush1.bf16.msra.mxu0 0
      %590 = vmatprep.subr.bf16.mxu0 0
      %591 = vmatpush1.bf16.msra.mxu0 0
      %592 = vmatprep.subr.bf16.mxu0 0
      %593 = vmatpush1.bf16.msra.mxu0 0
      %594 = vmatprep.subr.bf16.mxu0 0
      %595 = vmatpush1.bf16.msra.mxu0 0
      %596 = vmatprep.subr.bf16.mxu0 0
      %597 = vmatpush1.bf16.msra.mxu0 0
      %598 = vmatprep.subr.bf16.mxu0 0
      %599 = vmatpush1.bf16.msra.mxu0 0
      %600 = vmatprep.subr.bf16.mxu0 0
      %601 = vmatpush1.bf16.msra.mxu0 0
      %602 = vmatprep.subr.bf16.mxu0 0
      %603 = vmatpush1.bf16.msra.mxu0 0
      %604 = vmatprep.subr.bf16.mxu0 0
      %605 = vmatpush1.bf16.msra.mxu0 0
      %606 = vmatprep.subr.bf16.mxu0 0
      %607 = vmatpush1.bf16.msra.mxu0 0
      %608 = vmatprep.subr.bf16.mxu0 0
      %609 = vmatpush1.bf16.msra.mxu0 0
      %610 = vmatprep.subr.bf16.mxu0 0
      %611 = vmatpush1.bf16.msra.mxu0 0
      %612 = vmatprep.subr.bf16.mxu0 0
      %613 = vmatpush1.bf16.msra.mxu0 0
      %614 = vmatprep.mubr.bf16.mxu0 0
      %615 = vmatmul.mubr.bf16.gmra.mrb[0].mxu0 %v570
      %v616 = vpop.f32.mrb[0].mxu0
      %v617 = vadd.f32 0.0, %v616
      %v618 = vpop.f32.mrb[0].mxu0
      %v619 = vadd.f32 0.0, %v618
      %v620 = vpop.f32.mrb[0].mxu0
      %v621 = vpop.f32.mrb[0].mxu0
      %622 = vdwg.mxu0
      %623 = vmatprep.subr.bf16.mxu0 0
      %624 = vmatpush1.bf16.msra.mxu0 %v580
      %625 = vmatprep.subr.bf16.mxu0 0
      %626 = vmatpush1.bf16.msra.mxu0 0
      %627 = vmatprep.subr.bf16.mxu0 0
      %628 = vmatpush1.bf16.msra.mxu0 0
      %629 = vmatprep.subr.bf16.mxu0 0
      %630 = vmatpush1.bf16.msra.mxu0 0
      %631 = vmatprep.subr.bf16.mxu0 0
      %632 = vmatpush1.bf16.msra.mxu0 0
      %633 = vmatprep.subr.bf16.mxu0 0
      %634 = vmatpush1.bf16.msra.mxu0 0
      %635 = vmatprep.subr.bf16.mxu0 0
      %636 = vmatpush1.bf16.msra.mxu0 0
      %637 = vmatprep.subr.bf16.mxu0 0
      %638 = vmatpush1.bf16.msra.mxu0 0
      %639 = vmatprep.subr.bf16.mxu0 0
      %640 = vmatpush1.bf16.msra.mxu0 0
      %641 = vmatprep.subr.bf16.mxu0 0
      %642 = vmatpush1.bf16.msra.mxu0 0
      %643 = vmatprep.subr.bf16.mxu0 0
      %644 = vmatpush1.bf16.msra.mxu0 0
      %645 = vmatprep.subr.bf16.mxu0 0
      %646 = vmatpush1.bf16.msra.mxu0 0
      %647 = vmatprep.subr.bf16.mxu0 0
      %648 = vmatpush1.bf16.msra.mxu0 0
      %649 = vmatprep.subr.bf16.mxu0 0
      %650 = vmatpush1.bf16.msra.mxu0 0
      %651 = vmatprep.subr.bf16.mxu0 0
      %652 = vmatpush1.bf16.msra.mxu0 0
      %653 = vmatprep.subr.bf16.mxu0 0
      %654 = vmatpush1.bf16.msra.mxu0 0
      %655 = vmatprep.mubr.bf16.mxu0 0
      %656 = vmatmul.mubr.bf16.gmra.mrb[0].mxu0 %v570
      %v657 = vpop.f32.mrb[0].mxu0
      %v658 = vadd.f32 0.0, %v657
      %v659 = vpop.f32.mrb[0].mxu0
      %v660 = vpop.f32.mrb[0].mxu0
      %v661 = vpop.f32.mrb[0].mxu0
      %662 = vdwg.mxu0
      %v665 = vcombine.low %v617, %v619
      %667 = vst [vmem:[%s305] sm:$0xff] %v665
      %vm668 = vcmask 551936
      %669 = vst.msk [vmem:[%s305 + $0x8] sm:$0xf] %vm668, %v658
      %v670 = vld [vmem:[#allocation2] sm:$0xff]
      %v671 = vld [vmem:[#allocation2 + $0x8] sm:$0xf]
      %s672 = scalar_lea.vmem %s6, 2
      %v673 = vld [vmem:[%s672] sm:$0x3]
      %v676 = vunpack.c.l.b16 %v670
      %v677 = vunpack.c.h.b16 %v670
      %v678 = vunpack.c.l.b16 %v671
      %v679 = vpack.c.b16 %v676, %v676
      %v680 = vpack.c.b16 %v677, %v677
      %v681 = vpack.c.b16 %v678, %v678
      %682 = vrot.lane.b32.xlu0 %v679, 127
      %v683 = vpop.permute.xlu0 %682
      %684 = vrot.lane.b32.xlu0 %v680, 127
      %v685 = vpop.permute.xlu0 %684
      %686 = vrot.lane.b32.xlu0 %v681, 127
      %v687 = vpop.permute.xlu0 %686
      %vm688 = vcmask 1039360
      %v689 = vsel %vm688, %v683, %v685
      %v690 = vsel %vm688, %v685, %v687
      %v692 = vsel %vm568, %v673, 0
      %v695 = vsel %vm572, %v689, 0
      %v698 = vsel %vm572, %v690, 0
      %v701 = vsel %vm572, %v687, 0
      %703 = vmatprep.subr.bf16.mxu0 %v698
      %704 = vmatpush1.bf16.msra.mxu0 %v695
      %705 = vmatprep.subr.bf16.mxu0 0
      %706 = vmatpush1.bf16.msra.mxu0 0
      %707 = vmatprep.subr.bf16.mxu0 0
      %708 = vmatpush1.bf16.msra.mxu0 0
      %709 = vmatprep.subr.bf16.mxu0 0
      %710 = vmatpush1.bf16.msra.mxu0 0
      %711 = vmatprep.subr.bf16.mxu0 0
      %712 = vmatpush1.bf16.msra.mxu0 0
      %713 = vmatprep.subr.bf16.mxu0 0
      %714 = vmatpush1.bf16.msra.mxu0 0
      %715 = vmatprep.subr.bf16.mxu0 0
      %716 = vmatpush1.bf16.msra.mxu0 0
      %717 = vmatprep.subr.bf16.mxu0 0
      %718 = vmatpush1.bf16.msra.mxu0 0
      %719 = vmatprep.subr.bf16.mxu0 0
      %720 = vmatpush1.bf16.msra.mxu0 0
      %721 = vmatprep.subr.bf16.mxu0 0
      %722 = vmatpush1.bf16.msra.mxu0 0
      %723 = vmatprep.subr.bf16.mxu0 0
      %724 = vmatpush1.bf16.msra.mxu0 0
      %725 = vmatprep.subr.bf16.mxu0 0
      %726 = vmatpush1.bf16.msra.mxu0 0
      %727 = vmatprep.subr.bf16.mxu0 0
      %728 = vmatpush1.bf16.msra.mxu0 0
      %729 = vmatprep.subr.bf16.mxu0 0
      %730 = vmatpush1.bf16.msra.mxu0 0
      %731 = vmatprep.subr.bf16.mxu0 0
      %732 = vmatpush1.bf16.msra.mxu0 0
      %733 = vmatprep.subr.bf16.mxu0 0
      %734 = vmatpush1.bf16.msra.mxu0 0
      %735 = vmatprep.mubr.bf16.mxu0 0
      %736 = vmatmul.mubr.bf16.gmra.mrb[0].mxu0 %v692
      %v737 = vpop.f32.mrb[0].mxu0
      %v738 = vadd.f32 0.0, %v737
      %v739 = vpop.f32.mrb[0].mxu0
      %v740 = vadd.f32 0.0, %v739
      %v741 = vpop.f32.mrb[0].mxu0
      %v742 = vpop.f32.mrb[0].mxu0
      %743 = vdwg.mxu0
      %744 = vmatprep.subr.bf16.mxu0 0
      %745 = vmatpush1.bf16.msra.mxu0 %v701
      %746 = vmatprep.subr.bf16.mxu0 0
      %747 = vmatpush1.bf16.msra.mxu0 0
      %748 = vmatprep.subr.bf16.mxu0 0
      %749 = vmatpush1.bf16.msra.mxu0 0
      %750 = vmatprep.subr.bf16.mxu0 0
      %751 = vmatpush1.bf16.msra.mxu0 0
      %752 = vmatprep.subr.bf16.mxu0 0
      %753 = vmatpush1.bf16.msra.mxu0 0
      %754 = vmatprep.subr.bf16.mxu0 0
      %755 = vmatpush1.bf16.msra.mxu0 0
      %756 = vmatprep.subr.bf16.mxu0 0
      %757 = vmatpush1.bf16.msra.mxu0 0
      %758 = vmatprep.subr.bf16.mxu0 0
      %759 = vmatpush1.bf16.msra.mxu0 0
      %760 = vmatprep.subr.bf16.mxu0 0
      %761 = vmatpush1.bf16.msra.mxu0 0
      %762 = vmatprep.subr.bf16.mxu0 0
      %763 = vmatpush1.bf16.msra.mxu0 0
      %764 = vmatprep.subr.bf16.mxu0 0
      %765 = vmatpush1.bf16.msra.mxu0 0
      %766 = vmatprep.subr.bf16.mxu0 0
      %767 = vmatpush1.bf16.msra.mxu0 0
      %768 = vmatprep.subr.bf16.mxu0 0
      %769 = vmatpush1.bf16.msra.mxu0 0
      %770 = vmatprep.subr.bf16.mxu0 0
      %771 = vmatpush1.bf16.msra.mxu0 0
      %772 = vmatprep.subr.bf16.mxu0 0
      %773 = vmatpush1.bf16.msra.mxu0 0
      %774 = vmatprep.subr.bf16.mxu0 0
      %775 = vmatpush1.bf16.msra.mxu0 0
      %776 = vmatprep.mubr.bf16.mxu0 0
      %777 = vmatmul.mubr.bf16.gmra.mrb[0].mxu0 %v692
      %v778 = vpop.f32.mrb[0].mxu0
      %v779 = vadd.f32 0.0, %v778
      %v780 = vpop.f32.mrb[0].mxu0
      %v781 = vpop.f32.mrb[0].mxu0
      %v782 = vpop.f32.mrb[0].mxu0
      %783 = vdwg.mxu0
      %v784 = vld [vmem:[%s305] sm:$0xff]
      %v785 = vld [vmem:[%s305 + $0x8] sm:$0xf]
      %v788 = vcombine.low %v738, %v740
      %v790 = vadd.f32 %v784, %v788
      %v791 = vadd.f32 %v785, %v779
      %792 = vst [vmem:[%s305] sm:$0xff] %v790
      %793 = vst.msk [vmem:[%s305 + $0x8] sm:$0xf] %vm668, %v791
      %v794 = vld [vmem:[#allocation2] sm:$0xff]
      %v795 = vld [vmem:[#allocation2 + $0x8] sm:$0xf]
      %s796 = scalar_lea.vmem %s6, 4
      %v797 = vld [vmem:[%s796] sm:$0x3]
      %v800 = vunpack.c.l.b16 %v794
      %v801 = vunpack.c.h.b16 %v794
      %v802 = vunpack.c.l.b16 %v795
      %v803 = vpack.c.b16 %v800, %v800
      %v804 = vpack.c.b16 %v801, %v801
      %v805 = vpack.c.b16 %v802, %v802
      %806 = vrot.lane.b32.xlu0 %v803, 126
      %v807 = vpop.permute.xlu0 %806
      %808 = vrot.lane.b32.xlu0 %v804, 126
      %v809 = vpop.permute.xlu0 %808
      %810 = vrot.lane.b32.xlu0 %v805, 126
      %v811 = vpop.permute.xlu0 %810
      %vm812 = vcmask 1031168
      %v813 = vsel %vm812, %v807, %v809
      %v814 = vsel %vm812, %v809, %v811
      %v816 = vsel %vm568, %v797, 0
      %v819 = vsel %vm572, %v813, 0
      %v822 = vsel %vm572, %v814, 0
      %v825 = vsel %vm572, %v811, 0
      %827 = vmatprep.subr.bf16.mxu0 %v822
      %828 = vmatpush1.bf16.msra.mxu0 %v819
      %829 = vmatprep.subr.bf16.mxu0 0
      %830 = vmatpush1.bf16.msra.mxu0 0
      %831 = vmatprep.subr.bf16.mxu0 0
      %832 = vmatpush1.bf16.msra.mxu0 0
      %833 = vmatprep.subr.bf16.mxu0 0
      %834 = vmatpush1.bf16.msra.mxu0 0
      %835 = vmatprep.subr.bf16.mxu0 0
      %836 = vmatpush1.bf16.msra.mxu0 0
      %837 = vmatprep.subr.bf16.mxu0 0
      %838 = vmatpush1.bf16.msra.mxu0 0
      %839 = vmatprep.subr.bf16.mxu0 0
      %840 = vmatpush1.bf16.msra.mxu0 0
      %841 = vmatprep.subr.bf16.mxu0 0
      %842 = vmatpush1.bf16.msra.mxu0 0
      %843 = vmatprep.subr.bf16.mxu0 0
      %844 = vmatpush1.bf16.msra.mxu0 0
      %845 = vmatprep.subr.bf16.mxu0 0
      %846 = vmatpush1.bf16.msra.mxu0 0
      %847 = vmatprep.subr.bf16.mxu0 0
      %848 = vmatpush1.bf16.msra.mxu0 0
      %849 = vmatprep.subr.bf16.mxu0 0
      %850 = vmatpush1.bf16.msra.mxu0 0
      %851 = vmatprep.subr.bf16.mxu0 0
      %852 = vmatpush1.bf16.msra.mxu0 0
      %853 = vmatprep.subr.bf16.mxu0 0
      %854 = vmatpush1.bf16.msra.mxu0 0
      %855 = vmatprep.subr.bf16.mxu0 0
      %856 = vmatpush1.bf16.msra.mxu0 0
      %857 = vmatprep.subr.bf16.mxu0 0
      %858 = vmatpush1.bf16.msra.mxu0 0
      %859 = vmatprep.mubr.bf16.mxu0 0
      %860 = vmatmul.mubr.bf16.gmra.mrb[0].mxu0 %v816
      %v861 = vpop.f32.mrb[0].mxu0
      %v862 = vadd.f32 0.0, %v861
      %v863 = vpop.f32.mrb[0].mxu0
      %v864 = vadd.f32 0.0, %v863
      %v865 = vpop.f32.mrb[0].mxu0
      %v866 = vpop.f32.mrb[0].mxu0
      %867 = vdwg.mxu0
      %868 = vmatprep.subr.bf16.mxu0 0
      %869 = vmatpush1.bf16.msra.mxu0 %v825
      %870 = vmatprep.subr.bf16.mxu0 0
      %871 = vmatpush1.bf16.msra.mxu0 0
      %872 = vmatprep.subr.bf16.mxu0 0
      %873 = vmatpush1.bf16.msra.mxu0 0
      %874 = vmatprep.subr.bf16.mxu0 0
      %875 = vmatpush1.bf16.msra.mxu0 0
      %876 = vmatprep.subr.bf16.mxu0 0
      %877 = vmatpush1.bf16.msra.mxu0 0
      %878 = vmatprep.subr.bf16.mxu0 0
      %879 = vmatpush1.bf16.msra.mxu0 0
      %880 = vmatprep.subr.bf16.mxu0 0
      %881 = vmatpush1.bf16.msra.mxu0 0
      %882 = vmatprep.subr.bf16.mxu0 0
      %883 = vmatpush1.bf16.msra.mxu0 0
      %884 = vmatprep.subr.bf16.mxu0 0
      %885 = vmatpush1.bf16.msra.mxu0 0
      %886 = vmatprep.subr.bf16.mxu0 0
      %887 = vmatpush1.bf16.msra.mxu0 0
      %888 = vmatprep.subr.bf16.mxu0 0
      %889 = vmatpush1.bf16.msra.mxu0 0
      %890 = vmatprep.subr.bf16.mxu0 0
      %891 = vmatpush1.bf16.msra.mxu0 0
      %892 = vmatprep.subr.bf16.mxu0 0
      %893 = vmatpush1.bf16.msra.mxu0 0
      %894 = vmatprep.subr.bf16.mxu0 0
      %895 = vmatpush1.bf16.msra.mxu0 0
      %896 = vmatprep.subr.bf16.mxu0 0
      %897 = vmatpush1.bf16.msra.mxu0 0
      %898 = vmatprep.subr.bf16.mxu0 0
      %899 = vmatpush1.bf16.msra.mxu0 0
      %900 = vmatprep.mubr.bf16.mxu0 0
      %901 = vmatmul.mubr.bf16.gmra.mrb[0].mxu0 %v816
      %v902 = vpop.f32.mrb[0].mxu0
      %v903 = vadd.f32 0.0, %v902
      %v904 = vpop.f32.mrb[0].mxu0
      %v905 = vpop.f32.mrb[0].mxu0
      %v906 = vpop.f32.mrb[0].mxu0
      %907 = vdwg.mxu0
      %v908 = vld [vmem:[%s305] sm:$0xff]
      %v909 = vld [vmem:[%s305 + $0x8] sm:$0xf]
      %v912 = vcombine.low %v862, %v864
      %v914 = vadd.f32 %v908, %v912
      %v915 = vadd.f32 %v909, %v903
      %916 = vst [vmem:[%s305] sm:$0xff] %v914
      %917 = vst.msk [vmem:[%s305 + $0x8] sm:$0xf] %vm668, %v915
      %v918 = vld [vmem:[#allocation2] sm:$0xff]
      %v919 = vld [vmem:[#allocation2 + $0x8] sm:$0xf]
      %s920 = scalar_lea.vmem %s6, 6
      %v921 = vld [vmem:[%s920] sm:$0x3]
      %v924 = vunpack.c.l.b16 %v918
      %v925 = vunpack.c.h.b16 %v918
      %v926 = vunpack.c.l.b16 %v919
      %v927 = vpack.c.b16 %v924, %v924
      %v928 = vpack.c.b16 %v925, %v925
      %v929 = vpack.c.b16 %v926, %v926
      %930 = vrot.lane.b32.xlu0 %v927, 110
      %v931 = vpop.permute.xlu0 %930
      %932 = vrot.lane.b32.xlu0 %v928, 110
      %v933 = vpop.permute.xlu0 %932
      %934 = vrot.lane.b32.xlu0 %v929, 110
      %v935 = vpop.permute.xlu0 %934
      %vm936 = vcmask 900096
      %v937 = vsel %vm936, %v931, %v933
      %v938 = vsel %vm936, %v933, %v935
      %v940 = vsel %vm568, %v921, 0
      %v943 = vsel %vm572, %v937, 0
      %v946 = vsel %vm572, %v938, 0
      %v949 = vsel %vm572, %v935, 0
      %951 = vmatprep.subr.bf16.mxu0 %v946
      %952 = vmatpush1.bf16.msra.mxu0 %v943
      %953 = vmatprep.subr.bf16.mxu0 0
      %954 = vmatpush1.bf16.msra.mxu0 0
      %955 = vmatprep.subr.bf16.mxu0 0
      %956 = vmatpush1.bf16.msra.mxu0 0
      %957 = vmatprep.subr.bf16.mxu0 0
      %958 = vmatpush1.bf16.msra.mxu0 0
      %959 = vmatprep.subr.bf16.mxu0 0
      %960 = vmatpush1.bf16.msra.mxu0 0
      %961 = vmatprep.subr.bf16.mxu0 0
      %962 = vmatpush1.bf16.msra.mxu0 0
      %963 = vmatprep.subr.bf16.mxu0 0
      %964 = vmatpush1.bf16.msra.mxu0 0
      %965 = vmatprep.subr.bf16.mxu0 0
      %966 = vmatpush1.bf16.msra.mxu0 0
      %967 = vmatprep.subr.bf16.mxu0 0
      %968 = vmatpush1.bf16.msra.mxu0 0
      %969 = vmatprep.subr.bf16.mxu0 0
      %970 = vmatpush1.bf16.msra.mxu0 0
      %971 = vmatprep.subr.bf16.mxu0 0
      %972 = vmatpush1.bf16.msra.mxu0 0
      %973 = vmatprep.subr.bf16.mxu0 0
      %974 = vmatpush1.bf16.msra.mxu0 0
      %975 = vmatprep.subr.bf16.mxu0 0
      %976 = vmatpush1.bf16.msra.mxu0 0
      %977 = vmatprep.subr.bf16.mxu0 0
      %978 = vmatpush1.bf16.msra.mxu0 0
      %979 = vmatprep.subr.bf16.mxu0 0
      %980 = vmatpush1.bf16.msra.mxu0 0
      %981 = vmatprep.subr.bf16.mxu0 0
      %982 = vmatpush1.bf16.msra.mxu0 0
      %983 = vmatprep.mubr.bf16.mxu0 0
      %984 = vmatmul.mubr.bf16.gmra.mrb[0].mxu0 %v940
      %v985 = vpop.f32.mrb[0].mxu0
      %v986 = vadd.f32 0.0, %v985
      %v987 = vpop.f32.mrb[0].mxu0
      %v988 = vadd.f32 0.0, %v987
      %v989 = vpop.f32.mrb[0].mxu0
      %v990 = vpop.f32.mrb[0].mxu0
      %991 = vdwg.mxu0
      %992 = vmatprep.subr.bf16.mxu0 0
      %993 = vmatpush1.bf16.msra.mxu0 %v949
      %994 = vmatprep.subr.bf16.mxu0 0
      %995 = vmatpush1.bf16.msra.mxu0 0
      %996 = vmatprep.subr.bf16.mxu0 0
      %997 = vmatpush1.bf16.msra.mxu0 0
      %998 = vmatprep.subr.bf16.mxu0 0
      %999 = vmatpush1.bf16.msra.mxu0 0
      %1000 = vmatprep.subr.bf16.mxu0 0
      %1001 = vmatpush1.bf16.msra.mxu0 0
      %1002 = vmatprep.subr.bf16.mxu0 0
      %1003 = vmatpush1.bf16.msra.mxu0 0
      %1004 = vmatprep.subr.bf16.mxu0 0
      %1005 = vmatpush1.bf16.msra.mxu0 0
      %1006 = vmatprep.subr.bf16.mxu0 0
      %1007 = vmatpush1.bf16.msra.mxu0 0
      %1008 = vmatprep.subr.bf16.mxu0 0
      %1009 = vmatpush1.bf16.msra.mxu0 0
      %1010 = vmatprep.subr.bf16.mxu0 0
      %1011 = vmatpush1.bf16.msra.mxu0 0
      %1012 = vmatprep.subr.bf16.mxu0 0
      %1013 = vmatpush1.bf16.msra.mxu0 0
      %1014 = vmatprep.subr.bf16.mxu0 0
      %1015 = vmatpush1.bf16.msra.mxu0 0
      %1016 = vmatprep.subr.bf16.mxu0 0
      %1017 = vmatpush1.bf16.msra.mxu0 0
      %1018 = vmatprep.subr.bf16.mxu0 0
      %1019 = vmatpush1.bf16.msra.mxu0 0
      %1020 = vmatprep.subr.bf16.mxu0 0
      %1021 = vmatpush1.bf16.msra.mxu0 0
      %1022 = vmatprep.subr.bf16.mxu0 0
      %1023 = vmatpush1.bf16.msra.mxu0 0
      %1024 = vmatprep.mubr.bf16.mxu0 0
      %1025 = vmatmul.mubr.bf16.gmra.mrb[0].mxu0 %v940
      %v1026 = vpop.f32.mrb[0].mxu0
      %v1027 = vadd.f32 0.0, %v1026
      %v1028 = vpop.f32.mrb[0].mxu0
      %v1029 = vpop.f32.mrb[0].mxu0
      %v1030 = vpop.f32.mrb[0].mxu0
      %1031 = vdwg.mxu0
      %v1032 = vld [vmem:[%s305] sm:$0xff]
      %v1033 = vld [vmem:[%s305 + $0x8] sm:$0xf]
      %v1036 = vcombine.low %v986, %v988
      %v1038 = vadd.f32 %v1032, %v1036
      %v1039 = vadd.f32 %v1033, %v1027
      %1040 = vst [vmem:[%s305] sm:$0xff] %v1038
      %1041 = vst.msk [vmem:[%s305 + $0x8] sm:$0xf] %vm668, %v1039
      %v1042 = vld [vmem:[#allocation2] sm:$0xff]
      %v1043 = vld [vmem:[#allocation2 + $0x8] sm:$0xf]
      %s1044 = scalar_lea.vmem %s6, 8
      %v1045 = vld [vmem:[%s1044] sm:$0x3]
      %v1048 = vunpack.c.l.b16 %v1042
      %v1049 = vunpack.c.h.b16 %v1042
      %v1050 = vunpack.c.l.b16 %v1043
      %v1051 = vpack.c.b16 %v1048, %v1048
      %v1052 = vpack.c.b16 %v1049, %v1049
      %v1053 = vpack.c.b16 %v1050, %v1050
      %1054 = vrot.lane.b32.xlu0 %v1051, 109
      %v1055 = vpop.permute.xlu0 %1054
      %1056 = vrot.lane.b32.xlu0 %v1052, 109
      %v1057 = vpop.permute.xlu0 %1056
      %1058 = vrot.lane.b32.xlu0 %v1053, 109
      %v1059 = vpop.permute.xlu0 %1058
      %vm1060 = vcmask 891904
      %v1061 = vsel %vm1060, %v1055, %v1057
      %v1062 = vsel %vm1060, %v1057, %v1059
      %v1064 = vsel %vm568, %v1045, 0
      %v1067 = vsel %vm572, %v1061, 0
      %v1070 = vsel %vm572, %v1062, 0
      %v1073 = vsel %vm572, %v1059, 0
      %1075 = vmatprep.subr.bf16.mxu0 %v1070
      %1076 = vmatpush1.bf16.msra.mxu0 %v1067
      %1077 = vmatprep.subr.bf16.mxu0 0
      %1078 = vmatpush1.bf16.msra.mxu0 0
      %1079 = vmatprep.subr.bf16.mxu0 0
      %1080 = vmatpush1.bf16.msra.mxu0 0
      %1081 = vmatprep.subr.bf16.mxu0 0
      %1082 = vmatpush1.bf16.msra.mxu0 0
      %1083 = vmatprep.subr.bf16.mxu0 0
      %1084 = vmatpush1.bf16.msra.mxu0 0
      %1085 = vmatprep.subr.bf16.mxu0 0
      %1086 = vmatpush1.bf16.msra.mxu0 0
      %1087 = vmatprep.subr.bf16.mxu0 0
      %1088 = vmatpush1.bf16.msra.mxu0 0
      %1089 = vmatprep.subr.bf16.mxu0 0
      %1090 = vmatpush1.bf16.msra.mxu0 0
      %1091 = vmatprep.subr.bf16.mxu0 0
      %1092 = vmatpush1.bf16.msra.mxu0 0
      %1093 = vmatprep.subr.bf16.mxu0 0
      %1094 = vmatpush1.bf16.msra.mxu0 0
      %1095 = vmatprep.subr.bf16.mxu0 0
      %1096 = vmatpush1.bf16.msra.mxu0 0
      %1097 = vmatprep.subr.bf16.mxu0 0
      %1098 = vmatpush1.bf16.msra.mxu0 0
      %1099 = vmatprep.subr.bf16.mxu0 0
      %1100 = vmatpush1.bf16.msra.mxu0 0
      %1101 = vmatprep.subr.bf16.mxu0 0
      %1102 = vmatpush1.bf16.msra.mxu0 0
      %1103 = vmatprep.subr.bf16.mxu0 0
      %1104 = vmatpush1.bf16.msra.mxu0 0
      %1105 = vmatprep.subr.bf16.mxu0 0
      %1106 = vmatpush1.bf16.msra.mxu0 0
      %1107 = vmatprep.mubr.bf16.mxu0 0
      %1108 = vmatmul.mubr.bf16.gmra.mrb[0].mxu0 %v1064
      %v1109 = vpop.f32.mrb[0].mxu0
      %v1110 = vadd.f32 0.0, %v1109
      %v1111 = vpop.f32.mrb[0].mxu0
      %v1112 = vadd.f32 0.0, %v1111
      %v1113 = vpop.f32.mrb[0].mxu0
      %v1114 = vpop.f32.mrb[0].mxu0
      %1115 = vdwg.mxu0
      %1116 = vmatprep.subr.bf16.mxu0 0
      %1117 = vmatpush1.bf16.msra.mxu0 %v1073
      %1118 = vmatprep.subr.bf16.mxu0 0
      %1119 = vmatpush1.bf16.msra.mxu0 0
      %1120 = vmatprep.subr.bf16.mxu0 0
      %1121 = vmatpush1.bf16.msra.mxu0 0
      %1122 = vmatprep.subr.bf16.mxu0 0
      %1123 = vmatpush1.bf16.msra.mxu0 0
      %1124 = vmatprep.subr.bf16.mxu0 0
      %1125 = vmatpush1.bf16.msra.mxu0 0
      %1126 = vmatprep.subr.bf16.mxu0 0
      %1127 = vmatpush1.bf16.msra.mxu0 0
      %1128 = vmatprep.subr.bf16.mxu0 0
      %1129 = vmatpush1.bf16.msra.mxu0 0
      %1130 = vmatprep.subr.bf16.mxu0 0
      %1131 = vmatpush1.bf16.msra.mxu0 0
      %1132 = vmatprep.subr.bf16.mxu0 0
      %1133 = vmatpush1.bf16.msra.mxu0 0
      %1134 = vmatprep.subr.bf16.mxu0 0
      %1135 = vmatpush1.bf16.msra.mxu0 0
      %1136 = vmatprep.subr.bf16.mxu0 0
      %1137 = vmatpush1.bf16.msra.mxu0 0
      %1138 = vmatprep.subr.bf16.mxu0 0
      %1139 = vmatpush1.bf16.msra.mxu0 0
      %1140 = vmatprep.subr.bf16.mxu0 0
      %1141 = vmatpush1.bf16.msra.mxu0 0
      %1142 = vmatprep.subr.bf16.mxu0 0
      %1143 = vmatpush1.bf16.msra.mxu0 0
      %1144 = vmatprep.subr.bf16.mxu0 0
      %1145 = vmatpush1.bf16.msra.mxu0 0
      %1146 = vmatprep.subr.bf16.mxu0 0
      %1147 = vmatpush1.bf16.msra.mxu0 0
      %1148 = vmatprep.mubr.bf16.mxu0 0
      %1149 = vmatmul.mubr.bf16.gmra.mrb[0].mxu0 %v1064
      %v1150 = vpop.f32.mrb[0].mxu0
      %v1151 = vadd.f32 0.0, %v1150
      %v1152 = vpop.f32.mrb[0].mxu0
      %v1153 = vpop.f32.mrb[0].mxu0
      %v1154 = vpop.f32.mrb[0].mxu0
      %1155 = vdwg.mxu0
      %v1156 = vld [vmem:[%s305] sm:$0xff]
      %v1157 = vld [vmem:[%s305 + $0x8] sm:$0xf]
      %v1160 = vcombine.low %v1110, %v1112
      %v1162 = vadd.f32 %v1156, %v1160
      %v1163 = vadd.f32 %v1157, %v1151
      %1164 = vst [vmem:[%s305] sm:$0xff] %v1162
      %1165 = vst.msk [vmem:[%s305 + $0x8] sm:$0xf] %vm668, %v1163
      %v1166 = vld [vmem:[#allocation2] sm:$0xff]
      %v1167 = vld [vmem:[#allocation2 + $0x8] sm:$0xf]
      %s1168 = scalar_lea.vmem %s6, 10
      %v1169 = vld [vmem:[%s1168] sm:$0x3]
      %v1172 = vunpack.c.l.b16 %v1166
      %v1173 = vunpack.c.h.b16 %v1166
      %v1174 = vunpack.c.l.b16 %v1167
      %v1175 = vpack.c.b16 %v1172, %v1172
      %v1176 = vpack.c.b16 %v1173, %v1173
      %v1177 = vpack.c.b16 %v1174, %v1174
      %1178 = vrot.lane.b32.xlu0 %v1175, 108
      %v1179 = vpop.permute.xlu0 %1178
      %1180 = vrot.lane.b32.xlu0 %v1176, 108
      %v1181 = vpop.permute.xlu0 %1180
      %1182 = vrot.lane.b32.xlu0 %v1177, 108
      %v1183 = vpop.permute.xlu0 %1182
      %vm1184 = vcmask 883712
      %v1185 = vsel %vm1184, %v1179, %v1181
      %v1186 = vsel %vm1184, %v1181, %v1183
      %v1188 = vsel %vm568, %v1169, 0
      %v1191 = vsel %vm572, %v1185, 0
      %v1194 = vsel %vm572, %v1186, 0
      %v1197 = vsel %vm572, %v1183, 0
      %1199 = vmatprep.subr.bf16.mxu0 %v1194
      %1200 = vmatpush1.bf16.msra.mxu0 %v1191
      %1201 = vmatprep.subr.bf16.mxu0 0
      %1202 = vmatpush1.bf16.msra.mxu0 0
      %1203 = vmatprep.subr.bf16.mxu0 0
      %1204 = vmatpush1.bf16.msra.mxu0 0
      %1205 = vmatprep.subr.bf16.mxu0 0
      %1206 = vmatpush1.bf16.msra.mxu0 0
      %1207 = vmatprep.subr.bf16.mxu0 0
      %1208 = vmatpush1.bf16.msra.mxu0 0
      %1209 = vmatprep.subr.bf16.mxu0 0
      %1210 = vmatpush1.bf16.msra.mxu0 0
      %1211 = vmatprep.subr.bf16.mxu0 0
      %1212 = vmatpush1.bf16.msra.mxu0 0
      %1213 = vmatprep.subr.bf16.mxu0 0
      %1214 = vmatpush1.bf16.msra.mxu0 0
      %1215 = vmatprep.subr.bf16.mxu0 0
      %1216 = vmatpush1.bf16.msra.mxu0 0
      %1217 = vmatprep.subr.bf16.mxu0 0
      %1218 = vmatpush1.bf16.msra.mxu0 0
      %1219 = vmatprep.subr.bf16.mxu0 0
      %1220 = vmatpush1.bf16.msra.mxu0 0
      %1221 = vmatprep.subr.bf16.mxu0 0
      %1222 = vmatpush1.bf16.msra.mxu0 0
      %1223 = vmatprep.subr.bf16.mxu0 0
      %1224 = vmatpush1.bf16.msra.mxu0 0
      %1225 = vmatprep.subr.bf16.mxu0 0
      %1226 = vmatpush1.bf16.msra.mxu0 0
      %1227 = vmatprep.subr.bf16.mxu0 0
      %1228 = vmatpush1.bf16.msra.mxu0 0
      %1229 = vmatprep.subr.bf16.mxu0 0
      %1230 = vmatpush1.bf16.msra.mxu0 0
      %1231 = vmatprep.mubr.bf16.mxu0 0
      %1232 = vmatmul.mubr.bf16.gmra.mrb[0].mxu0 %v1188
      %v1233 = vpop.f32.mrb[0].mxu0
      %v1234 = vadd.f32 0.0, %v1233
      %v1235 = vpop.f32.mrb[0].mxu0
      %v1236 = vadd.f32 0.0, %v1235
      %v1237 = vpop.f32.mrb[0].mxu0
      %v1238 = vpop.f32.mrb[0].mxu0
      %1239 = vdwg.mxu0
      %1240 = vmatprep.subr.bf16.mxu0 0
      %1241 = vmatpush1.bf16.msra.mxu0 %v1197
      %1242 = vmatprep.subr.bf16.mxu0 0
      %1243 = vmatpush1.bf16.msra.mxu0 0
      %1244 = vmatprep.subr.bf16.mxu0 0
      %1245 = vmatpush1.bf16.msra.mxu0 0
      %1246 = vmatprep.subr.bf16.mxu0 0
      %1247 = vmatpush1.bf16.msra.mxu0 0
      %1248 = vmatprep.subr.bf16.mxu0 0
      %1249 = vmatpush1.bf16.msra.mxu0 0
      %1250 = vmatprep.subr.bf16.mxu0 0
      %1251 = vmatpush1.bf16.msra.mxu0 0
      %1252 = vmatprep.subr.bf16.mxu0 0
      %1253 = vmatpush1.bf16.msra.mxu0 0
      %1254 = vmatprep.subr.bf16.mxu0 0
      %1255 = vmatpush1.bf16.msra.mxu0 0
      %1256 = vmatprep.subr.bf16.mxu0 0
      %1257 = vmatpush1.bf16.msra.mxu0 0
      %1258 = vmatprep.subr.bf16.mxu0 0
      %1259 = vmatpush1.bf16.msra.mxu0 0
      %1260 = vmatprep.subr.bf16.mxu0 0
      %1261 = vmatpush1.bf16.msra.mxu0 0
      %1262 = vmatprep.subr.bf16.mxu0 0
      %1263 = vmatpush1.bf16.msra.mxu0 0
      %1264 = vmatprep.subr.bf16.mxu0 0
      %1265 = vmatpush1.bf16.msra.mxu0 0
      %1266 = vmatprep.subr.bf16.mxu0 0
      %1267 = vmatpush1.bf16.msra.mxu0 0
      %1268 = vmatprep.subr.bf16.mxu0 0
      %1269 = vmatpush1.bf16.msra.mxu0 0
      %1270 = vmatprep.subr.bf16.mxu0 0
      %1271 = vmatpush1.bf16.msra.mxu0 0
      %1272 = vmatprep.mubr.bf16.mxu0 0
      %1273 = vmatmul.mubr.bf16.gmra.mrb[0].mxu0 %v1188
      %v1274 = vpop.f32.mrb[0].mxu0
      %v1275 = vadd.f32 0.0, %v1274
      %v1276 = vpop.f32.mrb[0].mxu0
      %v1277 = vpop.f32.mrb[0].mxu0
      %v1278 = vpop.f32.mrb[0].mxu0
      %1279 = vdwg.mxu0
      %v1280 = vld [vmem:[%s305] sm:$0xff]
      %v1281 = vld [vmem:[%s305 + $0x8] sm:$0xf]
      %v1284 = vcombine.low %v1234, %v1236
      %v1286 = vadd.f32 %v1280, %v1284
      %v1287 = vadd.f32 %v1281, %v1275
      %1288 = vst [vmem:[%s305] sm:$0xff] %v1286
      %1289 = vst.msk [vmem:[%s305 + $0x8] sm:$0xf] %vm668, %v1287
      %v1290 = vld [vmem:[#allocation2] sm:$0xff]
      %v1291 = vld [vmem:[#allocation2 + $0x8] sm:$0xf]
      %s1292 = scalar_lea.vmem %s6, 12
      %v1293 = vld [vmem:[%s1292] sm:$0x3]
      %v1296 = vunpack.c.l.b16 %v1290
      %v1297 = vunpack.c.h.b16 %v1290
      %v1298 = vunpack.c.l.b16 %v1291
      %v1299 = vpack.c.b16 %v1296, %v1296
      %v1300 = vpack.c.b16 %v1297, %v1297
      %v1301 = vpack.c.b16 %v1298, %v1298
      %1302 = vrot.lane.b32.xlu0 %v1299, 92
      %v1303 = vpop.permute.xlu0 %1302
      %1304 = vrot.lane.b32.xlu0 %v1300, 92
      %v1305 = vpop.permute.xlu0 %1304
      %1306 = vrot.lane.b32.xlu0 %v1301, 92
      %v1307 = vpop.permute.xlu0 %1306
      %vm1308 = vcmask 752640
      %v1309 = vsel %vm1308, %v1303, %v1305
      %v1310 = vsel %vm1308, %v1305, %v1307
      %v1312 = vsel %vm568, %v1293, 0
      %v1315 = vsel %vm572, %v1309, 0
      %v1318 = vsel %vm572, %v1310, 0
      %v1321 = vsel %vm572, %v1307, 0
      %1323 = vmatprep.subr.bf16.mxu0 %v1318
      %1324 = vmatpush1.bf16.msra.mxu0 %v1315
      %1325 = vmatprep.subr.bf16.mxu0 0
      %1326 = vmatpush1.bf16.msra.mxu0 0
      %1327 = vmatprep.subr.bf16.mxu0 0
      %1328 = vmatpush1.bf16.msra.mxu0 0
      %1329 = vmatprep.subr.bf16.mxu0 0
      %1330 = vmatpush1.bf16.msra.mxu0 0
      %1331 = vmatprep.subr.bf16.mxu0 0
      %1332 = vmatpush1.bf16.msra.mxu0 0
      %1333 = vmatprep.subr.bf16.mxu0 0
      %1334 = vmatpush1.bf16.msra.mxu0 0
      %1335 = vmatprep.subr.bf16.mxu0 0
      %1336 = vmatpush1.bf16.msra.mxu0 0
      %1337 = vmatprep.subr.bf16.mxu0 0
      %1338 = vmatpush1.bf16.msra.mxu0 0
      %1339 = vmatprep.subr.bf16.mxu0 0
      %1340 = vmatpush1.bf16.msra.mxu0 0
      %1341 = vmatprep.subr.bf16.mxu0 0
      %1342 = vmatpush1.bf16.msra.mxu0 0
      %1343 = vmatprep.subr.bf16.mxu0 0
      %1344 = vmatpush1.bf16.msra.mxu0 0
      %1345 = vmatprep.subr.bf16.mxu0 0
      %1346 = vmatpush1.bf16.msra.mxu0 0
      %1347 = vmatprep.subr.bf16.mxu0 0
      %1348 = vmatpush1.bf16.msra.mxu0 0
      %1349 = vmatprep.subr.bf16.mxu0 0
      %1350 = vmatpush1.bf16.msra.mxu0 0
      %1351 = vmatprep.subr.bf16.mxu0 0
      %1352 = vmatpush1.bf16.msra.mxu0 0
      %1353 = vmatprep.subr.bf16.mxu0 0
      %1354 = vmatpush1.bf16.msra.mxu0 0
      %1355 = vmatprep.mubr.bf16.mxu0 0
      %1356 = vmatmul.mubr.bf16.gmra.mrb[0].mxu0 %v1312
      %v1357 = vpop.f32.mrb[0].mxu0
      %v1358 = vadd.f32 0.0, %v1357
      %v1359 = vpop.f32.mrb[0].mxu0
      %v1360 = vadd.f32 0.0, %v1359
      %v1361 = vpop.f32.mrb[0].mxu0
      %v1362 = vpop.f32.mrb[0].mxu0
      %1363 = vdwg.mxu0
      %1364 = vmatprep.subr.bf16.mxu0 0
      %1365 = vmatpush1.bf16.msra.mxu0 %v1321
      %1366 = vmatprep.subr.bf16.mxu0 0
      %1367 = vmatpush1.bf16.msra.mxu0 0
      %1368 = vmatprep.subr.bf16.mxu0 0
      %1369 = vmatpush1.bf16.msra.mxu0 0
      %1370 = vmatprep.subr.bf16.mxu0 0
      %1371 = vmatpush1.bf16.msra.mxu0 0
      %1372 = vmatprep.subr.bf16.mxu0 0
      %1373 = vmatpush1.bf16.msra.mxu0 0
      %1374 = vmatprep.subr.bf16.mxu0 0
      %1375 = vmatpush1.bf16.msra.mxu0 0
      %1376 = vmatprep.subr.bf16.mxu0 0
      %1377 = vmatpush1.bf16.msra.mxu0 0
      %1378 = vmatprep.subr.bf16.mxu0 0
      %1379 = vmatpush1.bf16.msra.mxu0 0
      %1380 = vmatprep.subr.bf16.mxu0 0
      %1381 = vmatpush1.bf16.msra.mxu0 0
      %1382 = vmatprep.subr.bf16.mxu0 0
      %1383 = vmatpush1.bf16.msra.mxu0 0
      %1384 = vmatprep.subr.bf16.mxu0 0
      %1385 = vmatpush1.bf16.msra.mxu0 0
      %1386 = vmatprep.subr.bf16.mxu0 0
      %1387 = vmatpush1.bf16.msra.mxu0 0
      %1388 = vmatprep.subr.bf16.mxu0 0
      %1389 = vmatpush1.bf16.msra.mxu0 0
      %1390 = vmatprep.subr.bf16.mxu0 0
      %1391 = vmatpush1.bf16.msra.mxu0 0
      %1392 = vmatprep.subr.bf16.mxu0 0
      %1393 = vmatpush1.bf16.msra.mxu0 0
      %1394 = vmatprep.subr.bf16.mxu0 0
      %1395 = vmatpush1.bf16.msra.mxu0 0
      %1396 = vmatprep.mubr.bf16.mxu0 0
      %1397 = vmatmul.mubr.bf16.gmra.mrb[0].mxu0 %v1312
      %v1398 = vpop.f32.mrb[0].mxu0
      %v1399 = vadd.f32 0.0, %v1398
      %v1400 = vpop.f32.mrb[0].mxu0
      %v1401 = vpop.f32.mrb[0].mxu0
      %v1402 = vpop.f32.mrb[0].mxu0
      %1403 = vdwg.mxu0
      %v1404 = vld [vmem:[%s305] sm:$0xff]
      %v1405 = vld [vmem:[%s305 + $0x8] sm:$0xf]
      %v1408 = vcombine.low %v1358, %v1360
      %v1410 = vadd.f32 %v1404, %v1408
      %v1411 = vadd.f32 %v1405, %v1399
      %1412 = vst [vmem:[%s305] sm:$0xff] %v1410
      %1413 = vst.msk [vmem:[%s305 + $0x8] sm:$0xf] %vm668, %v1411
      %v1414 = vld [vmem:[#allocation2] sm:$0xff]
      %v1415 = vld [vmem:[#allocation2 + $0x8] sm:$0xf]
      %s1416 = scalar_lea.vmem %s6, 14
      %v1417 = vld [vmem:[%s1416] sm:$0x3]
      %v1420 = vunpack.c.l.b16 %v1414
      %v1421 = vunpack.c.h.b16 %v1414
      %v1422 = vunpack.c.l.b16 %v1415
      %v1423 = vpack.c.b16 %v1420, %v1420
      %v1424 = vpack.c.b16 %v1421, %v1421
      %v1425 = vpack.c.b16 %v1422, %v1422
      %1426 = vrot.lane.b32.xlu0 %v1423, 91
      %v1427 = vpop.permute.xlu0 %1426
      %1428 = vrot.lane.b32.xlu0 %v1424, 91
      %v1429 = vpop.permute.xlu0 %1428
      %1430 = vrot.lane.b32.xlu0 %v1425, 91
      %v1431 = vpop.permute.xlu0 %1430
      %vm1432 = vcmask 744448
      %v1433 = vsel %vm1432, %v1427, %v1429
      %v1434 = vsel %vm1432, %v1429, %v1431
      %v1436 = vsel %vm568, %v1417, 0
      %v1439 = vsel %vm572, %v1433, 0
      %v1442 = vsel %vm572, %v1434, 0
      %v1445 = vsel %vm572, %v1431, 0
      %1447 = vmatprep.subr.bf16.mxu0 %v1442
      %1448 = vmatpush1.bf16.msra.mxu0 %v1439
      %1449 = vmatprep.subr.bf16.mxu0 0
      %1450 = vmatpush1.bf16.msra.mxu0 0
      %1451 = vmatprep.subr.bf16.mxu0 0
      %1452 = vmatpush1.bf16.msra.mxu0 0
      %1453 = vmatprep.subr.bf16.mxu0 0
      %1454 = vmatpush1.bf16.msra.mxu0 0
      %1455 = vmatprep.subr.bf16.mxu0 0
      %1456 = vmatpush1.bf16.msra.mxu0 0
      %1457 = vmatprep.subr.bf16.mxu0 0
      %1458 = vmatpush1.bf16.msra.mxu0 0
      %1459 = vmatprep.subr.bf16.mxu0 0
      %1460 = vmatpush1.bf16.msra.mxu0 0
      %1461 = vmatprep.subr.bf16.mxu0 0
      %1462 = vmatpush1.bf16.msra.mxu0 0
      %1463 = vmatprep.subr.bf16.mxu0 0
      %1464 = vmatpush1.bf16.msra.mxu0 0
      %1465 = vmatprep.subr.bf16.mxu0 0
      %1466 = vmatpush1.bf16.msra.mxu0 0
      %1467 = vmatprep.subr.bf16.mxu0 0
      %1468 = vmatpush1.bf16.msra.mxu0 0
      %1469 = vmatprep.subr.bf16.mxu0 0
      %1470 = vmatpush1.bf16.msra.mxu0 0
      %1471 = vmatprep.subr.bf16.mxu0 0
      %1472 = vmatpush1.bf16.msra.mxu0 0
      %1473 = vmatprep.subr.bf16.mxu0 0
      %1474 = vmatpush1.bf16.msra.mxu0 0
      %1475 = vmatprep.subr.bf16.mxu0 0
      %1476 = vmatpush1.bf16.msra.mxu0 0
      %1477 = vmatprep.subr.bf16.mxu0 0
      %1478 = vmatpush1.bf16.msra.mxu0 0
      %1479 = vmatprep.mubr.bf16.mxu0 0
      %1480 = vmatmul.mubr.bf16.gmra.mrb[0].mxu0 %v1436
      %v1481 = vpop.f32.mrb[0].mxu0
      %v1482 = vadd.f32 0.0, %v1481
      %v1483 = vpop.f32.mrb[0].mxu0
      %v1484 = vadd.f32 0.0, %v1483
      %v1485 = vpop.f32.mrb[0].mxu0
      %v1486 = vpop.f32.mrb[0].mxu0
      %1487 = vdwg.mxu0
      %1488 = vmatprep.subr.bf16.mxu0 0
      %1489 = vmatpush1.bf16.msra.mxu0 %v1445
      %1490 = vmatprep.subr.bf16.mxu0 0
      %1491 = vmatpush1.bf16.msra.mxu0 0
      %1492 = vmatprep.subr.bf16.mxu0 0
      %1493 = vmatpush1.bf16.msra.mxu0 0
      %1494 = vmatprep.subr.bf16.mxu0 0
      %1495 = vmatpush1.bf16.msra.mxu0 0
      %1496 = vmatprep.subr.bf16.mxu0 0
      %1497 = vmatpush1.bf16.msra.mxu0 0
      %1498 = vmatprep.subr.bf16.mxu0 0
      %1499 = vmatpush1.bf16.msra.mxu0 0
      %1500 = vmatprep.subr.bf16.mxu0 0
      %1501 = vmatpush1.bf16.msra.mxu0 0
      %1502 = vmatprep.subr.bf16.mxu0 0
      %1503 = vmatpush1.bf16.msra.mxu0 0
      %1504 = vmatprep.subr.bf16.mxu0 0
      %1505 = vmatpush1.bf16.msra.mxu0 0
      %1506 = vmatprep.subr.bf16.mxu0 0
      %1507 = vmatpush1.bf16.msra.mxu0 0
      %1508 = vmatprep.subr.bf16.mxu0 0
      %1509 = vmatpush1.bf16.msra.mxu0 0
      %1510 = vmatprep.subr.bf16.mxu0 0
      %1511 = vmatpush1.bf16.msra.mxu0 0
      %1512 = vmatprep.subr.bf16.mxu0 0
      %1513 = vmatpush1.bf16.msra.mxu0 0
      %1514 = vmatprep.subr.bf16.mxu0 0
      %1515 = vmatpush1.bf16.msra.mxu0 0
      %1516 = vmatprep.subr.bf16.mxu0 0
      %1517 = vmatpush1.bf16.msra.mxu0 0
      %1518 = vmatprep.subr.bf16.mxu0 0
      %1519 = vmatpush1.bf16.msra.mxu0 0
      %1520 = vmatprep.mubr.bf16.mxu0 0
      %1521 = vmatmul.mubr.bf16.gmra.mrb[0].mxu0 %v1436
      %v1522 = vpop.f32.mrb[0].mxu0
      %v1523 = vadd.f32 0.0, %v1522
      %v1524 = vpop.f32.mrb[0].mxu0
      %v1525 = vpop.f32.mrb[0].mxu0
      %v1526 = vpop.f32.mrb[0].mxu0
      %1527 = vdwg.mxu0
      %v1528 = vld [vmem:[%s305] sm:$0xff]
      %v1529 = vld [vmem:[%s305 + $0x8] sm:$0xf]
      %v1532 = vcombine.low %v1482, %v1484
      %v1534 = vadd.f32 %v1528, %v1532
      %v1535 = vadd.f32 %v1529, %v1523
      %1536 = vst [vmem:[%s305] sm:$0xff] %v1534
      %1537 = vst.msk [vmem:[%s305 + $0x8] sm:$0xf] %vm668, %v1535
      %v1538 = vld [vmem:[#allocation2] sm:$0xff]
      %v1539 = vld [vmem:[#allocation2 + $0x8] sm:$0xf]
      %s1540 = scalar_lea.vmem %s6, 16
      %v1541 = vld [vmem:[%s1540] sm:$0x3]
      %v1544 = vunpack.c.l.b16 %v1538
      %v1545 = vunpack.c.h.b16 %v1538
      %v1546 = vunpack.c.l.b16 %v1539
      %v1547 = vpack.c.b16 %v1544, %v1544
      %v1548 = vpack.c.b16 %v1545, %v1545
      %v1549 = vpack.c.b16 %v1546, %v1546
      %1550 = vrot.lane.b32.xlu0 %v1547, 90
      %v1551 = vpop.permute.xlu0 %1550
      %1552 = vrot.lane.b32.xlu0 %v1548, 90
      %v1553 = vpop.permute.xlu0 %1552
      %1554 = vrot.lane.b32.xlu0 %v1549, 90
      %v1555 = vpop.permute.xlu0 %1554
      %vm1556 = vcmask 736256
      %v1557 = vsel %vm1556, %v1551, %v1553
      %v1558 = vsel %vm1556, %v1553, %v1555
      %v1560 = vsel %vm568, %v1541, 0
      %v1563 = vsel %vm572, %v1557, 0
      %v1566 = vsel %vm572, %v1558, 0
      %v1569 = vsel %vm572, %v1555, 0
      %1571 = vmatprep.subr.bf16.mxu0 %v1566
      %1572 = vmatpush1.bf16.msra.mxu0 %v1563
      %1573 = vmatprep.subr.bf16.mxu0 0
      %1574 = vmatpush1.bf16.msra.mxu0 0
      %1575 = vmatprep.subr.bf16.mxu0 0
      %1576 = vmatpush1.bf16.msra.mxu0 0
      %1577 = vmatprep.subr.bf16.mxu0 0
      %1578 = vmatpush1.bf16.msra.mxu0 0
      %1579 = vmatprep.subr.bf16.mxu0 0
      %1580 = vmatpush1.bf16.msra.mxu0 0
      %1581 = vmatprep.subr.bf16.mxu0 0
      %1582 = vmatpush1.bf16.msra.mxu0 0
      %1583 = vmatprep.subr.bf16.mxu0 0
      %1584 = vmatpush1.bf16.msra.mxu0 0
      %1585 = vmatprep.subr.bf16.mxu0 0
      %1586 = vmatpush1.bf16.msra.mxu0 0
      %1587 = vmatprep.subr.bf16.mxu0 0
      %1588 = vmatpush1.bf16.msra.mxu0 0
      %1589 = vmatprep.subr.bf16.mxu0 0
      %1590 = vmatpush1.bf16.msra.mxu0 0
      %1591 = vmatprep.subr.bf16.mxu0 0
      %1592 = vmatpush1.bf16.msra.mxu0 0
      %1593 = vmatprep.subr.bf16.mxu0 0
      %1594 = vmatpush1.bf16.msra.mxu0 0
      %1595 = vmatprep.subr.bf16.mxu0 0
      %1596 = vmatpush1.bf16.msra.mxu0 0
      %1597 = vmatprep.subr.bf16.mxu0 0
      %1598 = vmatpush1.bf16.msra.mxu0 0
      %1599 = vmatprep.subr.bf16.mxu0 0
      %1600 = vmatpush1.bf16.msra.mxu0 0
      %1601 = vmatprep.subr.bf16.mxu0 0
      %1602 = vmatpush1.bf16.msra.mxu0 0
      %1603 = vmatprep.mubr.bf16.mxu0 0
      %1604 = vmatmul.mubr.bf16.gmra.mrb[0].mxu0 %v1560
      %v1605 = vpop.f32.mrb[0].mxu0
      %v1606 = vadd.f32 0.0, %v1605
      %v1607 = vpop.f32.mrb[0].mxu0
      %v1608 = vadd.f32 0.0, %v1607
      %v1609 = vpop.f32.mrb[0].mxu0
      %v1610 = vpop.f32.mrb[0].mxu0
      %1611 = vdwg.mxu0
      %1612 = vmatprep.subr.bf16.mxu0 0
      %1613 = vmatpush1.bf16.msra.mxu0 %v1569
      %1614 = vmatprep.subr.bf16.mxu0 0
      %1615 = vmatpush1.bf16.msra.mxu0 0
      %1616 = vmatprep.subr.bf16.mxu0 0
      %1617 = vmatpush1.bf16.msra.mxu0 0
      %1618 = vmatprep.subr.bf16.mxu0 0
      %1619 = vmatpush1.bf16.msra.mxu0 0
      %1620 = vmatprep.subr.bf16.mxu0 0
      %1621 = vmatpush1.bf16.msra.mxu0 0
      %1622 = vmatprep.subr.bf16.mxu0 0
      %1623 = vmatpush1.bf16.msra.mxu0 0
      %1624 = vmatprep.subr.bf16.mxu0 0
      %1625 = vmatpush1.bf16.msra.mxu0 0
      %1626 = vmatprep.subr.bf16.mxu0 0
      %1627 = vmatpush1.bf16.msra.mxu0 0
      %1628 = vmatprep.subr.bf16.mxu0 0
      %1629 = vmatpush1.bf16.msra.mxu0 0
      %1630 = vmatprep.subr.bf16.mxu0 0
      %1631 = vmatpush1.bf16.msra.mxu0 0
      %1632 = vmatprep.subr.bf16.mxu0 0
      %1633 = vmatpush1.bf16.msra.mxu0 0
      %1634 = vmatprep.subr.bf16.mxu0 0
      %1635 = vmatpush1.bf16.msra.mxu0 0
      %1636 = vmatprep.subr.bf16.mxu0 0
      %1637 = vmatpush1.bf16.msra.mxu0 0
      %1638 = vmatprep.subr.bf16.mxu0 0
      %1639 = vmatpush1.bf16.msra.mxu0 0
      %1640 = vmatprep.subr.bf16.mxu0 0
      %1641 = vmatpush1.bf16.msra.mxu0 0
      %1642 = vmatprep.subr.bf16.mxu0 0
      %1643 = vmatpush1.bf16.msra.mxu0 0
      %1644 = vmatprep.mubr.bf16.mxu0 0
      %1645 = vmatmul.mubr.bf16.gmra.mrb[0].mxu0 %v1560
      %v1646 = vpop.f32.mrb[0].mxu0
      %v1647 = vadd.f32 0.0, %v1646
      %v1648 = vpop.f32.mrb[0].mxu0
      %v1649 = vpop.f32.mrb[0].mxu0
      %v1650 = vpop.f32.mrb[0].mxu0
      %1651 = vdwg.mxu0
      %v1652 = vld [vmem:[%s305] sm:$0xff]
      %v1653 = vld [vmem:[%s305 + $0x8] sm:$0xf]
      %v1656 = vcombine.low %v1606, %v1608
      %v1658 = vadd.f32 %v1652, %v1656
      %v1659 = vadd.f32 %v1653, %v1647
      %1660 = vst [vmem:[%s305] sm:$0xff] %v1658
      %1661 = vst.msk [vmem:[%s305 + $0x8] sm:$0xf] %vm668, %v1659
      %v1662 = vld [vmem:[%s7] sm:$0x7]
      %vm1663 = vcmp.gt.f32.partialorder %v1662, 0.5
      %v1664 = vld [vmem:[%s305] sm:$0xff]
      %v1665 = vld [vmem:[%s305 + $0x8] sm:$0xf]
      %v1666 = vsel %vm1663, 1, 0
      %v1667 = vlaneseq
      %v1668 = vshrl.u32 %v1667, 7
      %v1669 = vsub.s32 0, %v1668
      %v1670 = vrot.slane %v1666, %v1669
      %v1671 = vlaneseq
      %v1672 = vshrl.u32 %v1671, 7
      %v1673 = vsub.s32 1, %v1672
      %v1674 = vrot.slane %v1666, %v1673
      %v1675 = vlaneseq
      %v1676 = vshrl.u32 %v1675, 7
      %v1677 = vsub.s32 2, %v1676
      %v1678 = vrot.slane %v1666, %v1677
      %vm1679 = vcmp.eq.s32.totalorder %v1670, 1
      %vm1680 = vcmp.eq.s32.totalorder %v1674, 1
      %vm1681 = vcmp.eq.s32.totalorder %v1678, 1
      %v1683 = vcombine.high %v1664, %v1664
      %v1685 = vsel %vm1679, %v1664, 0.0
      %v1686 = vsel %vm1680, %v1683, 0.0
      %v1687 = vsel %vm1681, %v1665, 0.0
      %v1690 = vcombine.low %v1685, %v1686
      %1692 = vst [vmem:[%s305] sm:$0xff] %v1690
      %1693 = vst.msk [vmem:[%s305 + $0x8] sm:$0xf] %vm668, %v1687
      %p1694 = scmp.lt.s32.totalorder %s19, 1
      %s1695 = scalar_select %p1694, %s19, 1
      %s1696 = smul.addr %s1695, 3
      %s1697 = smul.addr %s1696, 4
      %s1698 = scalar_lea.vmem %s8, %s1697
      // Predicated region
      $region57: #{dense_block_forward.3} parent=51 // pred_check
        %p1699 = pneg %p210
      $region58: #{dense_block_forward.3} parent=51 // pred_check_branch
        %1701 = sbr.rel (%p1699) target = $region60
      $region59: #{dense_block_forward.3} parent=51 // pred_region
        _
      $region60: #{dense_block_forward.3} parent=51 // pred_fallthru
        _
    $region52: #{dense_block_forward.3} parent=5 // pred_fallthru
      _
    %p1702 = scmp.le.s32.totalorder 2, %s14
    // Predicated region
    $region61: #{dense_block_forward.3} parent=5 // pred_check
      %p1703 = pneg %p1702
    $region62: #{dense_block_forward.3} parent=5 // pred_check_branch
      %1705 = sbr.rel (%p1703) target = $region64
    $region63: #{dense_block_forward.3} parent=5 // pred_region
      %s1706 = ssub.s32 %s14, 2
      // Predicated region
      $region65: #{dense_block_forward.3} parent=63 // pred_check
        %p1707 = pneg %p216
      $region66: #{dense_block_forward.3} parent=63 // pred_check_branch
        %1709 = sbr.rel (%p1707) target = $region68
      $region67: #{dense_block_forward.3} parent=63 // pred_region
        %p1710 = scmp.lt.s32.totalorder %s20, 1
        %s1711 = scalar_select %p1710, %s20, 1
        %s1712 = smul.addr %s1711, 3
        %s1713 = smul.addr %s1712, 4
        %s1714 = scalar_lea.vmem %s8, %s1713
      $region68: #{dense_block_forward.3} parent=63 // pred_fallthru
        _
    $region64: #{dense_block_forward.3} parent=5 // pred_fallthru
      _
  $region6: #{dense_block_forward.3} parent=0 // loop_footer
    %s18 = sadd.s32 1, %s14
  $region7: #{dense_block_forward.3} parent=0 // loop_footer_branch
    %13 = sbr.rel target = $region3
  $region8: #{dense_block_forward.3} parent=0 // loop_exit
    _

</llo_original>
